<compile_context>
chip_gen: v7x
topology: tpu7x:2x2x1
jax: 0.10.0
libtpu: 0.0.40
codegen_flags: <defaults>
</compile_context>

<pallas_src>
import functools

import jax
import jax.numpy as jnp
import numpy as np
from jax.experimental import pallas as pl
from jax.experimental.pallas import tpu as pltpu


# --------------------------------------------------------------------------- #
# Kernel
# --------------------------------------------------------------------------- #
def _dilate_attn_kernel(q_ref, k_ref, v_ref, o_ref, *, scale, kernel_size,
                        dilation, Wp, Lq, chunk):
    # q_ref / o_ref : [bblk, hd, Lq]     (Lq = H * Wp, width-stride Wp)
    # k_ref / v_ref : [bblk, hd, Lk]     (Lk = (Hp+1) * Wp, zero padded)
    offs = [(ki * dilation) * Wp + (kj * dilation)
            for ki in range(kernel_size) for kj in range(kernel_size)]

    # Static chunk loop over the lane (flattened spatial) axis to bound vreg
    # pressure; for small maps this is a single iteration.
    for c0 in range(0, Lq, chunk):
        cl = min(chunk, Lq - c0)
        q = q_ref[:, :, c0:c0 + cl].astype(jnp.float32)           # [b, hd, cl]

        # Attention logits over the kk neighbourhood positions (VPU + XLU).
        logits = []
        for off in offs:
            kwin = k_ref[:, :, off + c0:off + c0 + cl].astype(jnp.float32)
            logits.append(jnp.sum(q * kwin, axis=1) * scale)      # [b, cl]

        # Numerically stable softmax with deferred normalization.
        m = logits[0]
        for lg in logits[1:]:
            m = jnp.maximum(m, lg)

        denom = jnp.zeros_like(m)                                 # [b, cl]
        acc = jnp.zeros_like(q)                                   # [b, hd, cl]
        for j, off in enumerate(offs):
            p = jnp.exp(logits[j] - m)                            # EUP
            denom = denom + p
            vwin = v_ref[:, :, off + c0:off + c0 + cl].astype(jnp.float32)
            acc = acc + p[:, None, :] * vwin

        # TODO(synk): attn_drop > 0 (dropout) not implemented; p=0 is identity.
        inv = pl.reciprocal(denom)[:, None, :]                    # one recip/pixel
        o_ref[:, :, c0:c0 + cl] = (acc * inv).astype(o_ref.dtype)


# --------------------------------------------------------------------------- #
# Tiling heuristics
# --------------------------------------------------------------------------- #
def _pick_head_block(BH, per_head_bytes, max_block_bytes=6 << 20,
                     target_bytes=1 << 20):
    """Heads per grid step: bounded payload, >=2 grid steps (v7x dual-TC)."""
    divisors = [c for c in range(1, BH + 1) if BH % c == 0]
    cands = [c for c in divisors if c * per_head_bytes <= max_block_bytes]
    cands = [c for c in cands if BH // c >= 2] or cands or [1]
    for c in cands:
        if c * per_head_bytes >= target_bytes:
            return c
    return cands[-1]


def _pick_lane_chunk(Lq, bblk, head_dim, kk, budget_bytes=128 * 1024):
    """Bound the per-chunk f32 working set to roughly half the vreg file."""
    per_lane = 4 * bblk * (4 * head_dim + 2 * kk + 2)
    chunk = max(128, budget_bytes // per_lane)
    if chunk >= Lq:
        return Lq
    return max(128, (chunk // 128) * 128)


# --------------------------------------------------------------------------- #
# Wrapper (PyTorch-style NCHW in, [B, H, W, d] out)
# --------------------------------------------------------------------------- #
def dilate_attention(q, k, v, head_dim, kernel_size=3, dilation=1,
                     qk_scale=None):
    B, d, H, W = q.shape
    assert d % head_dim == 0, "channels must be divisible by head_dim"
    nh = d // head_dim
    BH = B * nh
    kk = kernel_size * kernel_size
    pad = dilation * (kernel_size - 1) // 2
    Hp, Wp = H + 2 * pad, W + 2 * pad
    Lq = H * Wp            # q/out flattened with width-stride Wp (pad cols on right)
    Lk = (Hp + 1) * Wp     # one extra zero row keeps the furthest window in-bounds
    scale = qk_scale if qk_scale is not None else head_dim ** (-0.5)

    # ---- glue: one zero-pad per tensor; no 9x im2col, no transposes ---------
    q_p = jnp.pad(q, ((0, 0), (0, 0), (0, 0), (0, Wp - W))) \
             .reshape(BH, head_dim, Lq)
    k_p = jnp.pad(k, ((0, 0), (0, 0), (pad, pad + 1), (pad, pad))) \
             .reshape(BH, head_dim, Lk)
    v_p = jnp.pad(v, ((0, 0), (0, 0), (pad, pad + 1), (pad, pad))) \
             .reshape(BH, head_dim, Lk)

    itemsize = jnp.dtype(q.dtype).itemsize
    per_head_bytes = itemsize * head_dim * (2 * Lq + 2 * Lk)
    bblk = _pick_head_block(BH, per_head_bytes)
    chunk = _pick_lane_chunk(Lq, bblk, head_dim, kk)
    # Explicit (conservative) VMEM budget: works within v5e/v6e/v7x scoped limits.
    vmem_limit = int(min(max(6 * bblk * per_head_bytes, 16 * 2**20), 56 * 2**20))

    kernel = functools.partial(
        _dilate_attn_kernel, scale=scale, kernel_size=kernel_size,
        dilation=dilation, Wp=Wp, Lq=Lq, chunk=chunk)

    out = pl.pallas_call(
        kernel,
        out_shape=jax.ShapeDtypeStruct((BH, head_dim, Lq), q.dtype),
        grid_spec=pltpu.PrefetchScalarGridSpec(
            num_scalar_prefetch=0,
            grid=(BH // bblk,),
            in_specs=[
                pl.BlockSpec((bblk, head_dim, Lq), lambda b: (b, 0, 0)),
                pl.BlockSpec((bblk, head_dim, Lk), lambda b: (b, 0, 0)),
                pl.BlockSpec((bblk, head_dim, Lk), lambda b: (b, 0, 0)),
            ],
            out_specs=pl.BlockSpec((bblk, head_dim, Lq), lambda b: (b, 0, 0)),
        ),
        compiler_params=pltpu.CompilerParams(
            dimension_semantics=("parallel",),
            vmem_limit_bytes=vmem_limit),
    )(q_p, k_p, v_p)

    # [BH, hd, H, Wp] -> crop pad columns -> [B, H, W, d]
    # (head-major channel order, matching x.transpose(1,2).reshape(B,H,W,d))
    x = out.reshape(B, nh, head_dim, H, Wp)[..., :W]
    return x.transpose(0, 3, 4, 1, 2).reshape(B, H, W, d)


# --------------------------------------------------------------------------- #
# Pure-JAX reference (mirrors the PyTorch forward), for validation only.
# --------------------------------------------------------------------------- #
def _unfold(x, kernel_size, dilation):
    """nn.Unfold(kernel_size, dilation, dilation*(k-1)//2, 1) equivalent.
    x: [B, C, H, W] -> [B, C, kk, H, W] (zero padding, same spatial size)."""
    B, C, H, W = x.shape
    pad = dilation * (kernel_size - 1) // 2
    xp = jnp.pad(x, ((0, 0), (0, 0), (pad, pad), (pad, pad)))
    patches = []
    for ki in range(kernel_size):
        for kj in range(kernel_size):
            patches.append(xp[:, :, ki * dilation:ki * dilation + H,
                                    kj * dilation:kj * dilation + W])
    return jnp.stack(patches, axis=2)


def _reference(q, k, v, head_dim, kernel_size=3, dilation=1, qk_scale=None):
    B, d, H, W = q.shape
    nh = d // head_dim
    L = H * W
    kk = kernel_size * kernel_size
    scale = qk_scale if qk_scale is not None else head_dim ** (-0.5)
    qr = q.reshape(B, nh, head_dim, 1, L).transpose(0, 1, 4, 3, 2)
    ku = (_unfold(k, kernel_size, dilation)
          .reshape(B, nh, head_dim, kk, L).transpose(0, 1, 4, 2, 3))
    attn = jnp.einsum('bnlod,bnldk->bnlok', qr, ku) * scale
    attn = jax.nn.softmax(attn, axis=-1)
    vu = (_unfold(v, kernel_size, dilation)
          .reshape(B, nh, head_dim, kk, L).transpose(0, 1, 4, 3, 2))
    x = jnp.einsum('bnlok,bnlkd->bnlod', attn, vu)
    return x.transpose(0, 2, 1, 3, 4).reshape(B, H, W, d)


if __name__ == "__main__":
    key = jax.random.PRNGKey(0)
    configs = [
        # (B, d, H, W, head_dim, kernel_size, dilation)
        (2, 16, 16, 16, 8, 3, 1),
        (2, 16, 16, 16, 8, 3, 2),
    ]
    for (B, d, H, W, head_dim, ksz, dil) in configs:
        key, kq, kk_, kv = jax.random.split(key, 4)
        q = jax.random.normal(kq, (B, d, H, W), dtype=jnp.float32)
        k = jax.random.normal(kk_, (B, d, H, W), dtype=jnp.float32)
        v = jax.random.normal(kv, (B, d, H, W), dtype=jnp.float32)

        out = jax.block_until_ready(dilate_attention(q, k, v, head_dim, ksz, dil))
        ref = _reference(q, k, v, head_dim, ksz, dil)
        np.testing.assert_allclose(np.asarray(out), np.asarray(ref),
                                   rtol=1e-5, atol=1e-5)
    print("KERNEL_OK")
</pallas_src>

<mosaic_0001>
module attributes {stable_mosaic.version = 11 : i64} {
  func.func @_dilate_attn_kernel(%arg0: i32, %arg1: memref<2x8x288xf32, #tpu.memory_space<vmem>>, %arg2: memref<2x8x342xf32, #tpu.memory_space<vmem>>, %arg3: memref<2x8x342xf32, #tpu.memory_space<vmem>>, %arg4: memref<2x8x288xf32, #tpu.memory_space<vmem>>) attributes {dimension_semantics = [#tpu.dimension_semantics<parallel>], iteration_bounds = array<i64: 2>, scalar_prefetch = 0 : i64, scratch_operands = 0 : i64, tpu.core_type = #tpu.core_type<tc>, window_params = [{transform_indices = @transform_0, window_bounds = array<i64: 2, 8, 288>}, {transform_indices = @transform_1, window_bounds = array<i64: 2, 8, 342>}, {transform_indices = @transform_2, window_bounds = array<i64: 2, 8, 342>}, {transform_indices = @transform_3, window_bounds = array<i64: 2, 8, 288>}]} {
    %c0 = arith.constant 0 : index
    %c0_0 = arith.constant 0 : index
    %c0_1 = arith.constant 0 : index
    %0 = vector.load %arg1[%c0, %c0_0, %c0_1] : memref<2x8x288xf32, #tpu.memory_space<vmem>>, vector<2x8x288xf32>
    %c0_2 = arith.constant 0 : index
    %c0_3 = arith.constant 0 : index
    %c0_4 = arith.constant 0 : index
    %1 = vector.load %arg2[%c0_2, %c0_3, %c0_4] : memref<2x8x342xf32, #tpu.memory_space<vmem>>, vector<2x8x288xf32>
    %2 = arith.mulf %0, %1 : vector<2x8x288xf32>
    %cst = arith.constant dense<0.000000e+00> : vector<2x288xf32>
    %3 = vector.multi_reduction <add>, %2, %cst [1] : vector<2x8x288xf32> to vector<2x288xf32>
    %cst_5 = arith.constant 0.353553385 : f32
    %4 = vector.broadcast %cst_5 : f32 to vector<2x288xf32>
    %5 = arith.mulf %3, %4 : vector<2x288xf32>
    %c0_6 = arith.constant 0 : index
    %c0_7 = arith.constant 0 : index
    %c1 = arith.constant 1 : index
    %6 = vector.load %arg2[%c0_6, %c0_7, %c1] : memref<2x8x342xf32, #tpu.memory_space<vmem>>, vector<2x8x288xf32>
    %7 = arith.mulf %0, %6 : vector<2x8x288xf32>
    %cst_8 = arith.constant dense<0.000000e+00> : vector<2x288xf32>
    %8 = vector.multi_reduction <add>, %7, %cst_8 [1] : vector<2x8x288xf32> to vector<2x288xf32>
    %cst_9 = arith.constant 0.353553385 : f32
    %9 = vector.broadcast %cst_9 : f32 to vector<2x288xf32>
    %10 = arith.mulf %8, %9 : vector<2x288xf32>
    %c0_10 = arith.constant 0 : index
    %c0_11 = arith.constant 0 : index
    %c2 = arith.constant 2 : index
    %11 = vector.load %arg2[%c0_10, %c0_11, %c2] : memref<2x8x342xf32, #tpu.memory_space<vmem>>, vector<2x8x288xf32>
    %12 = arith.mulf %0, %11 : vector<2x8x288xf32>
    %cst_12 = arith.constant dense<0.000000e+00> : vector<2x288xf32>
    %13 = vector.multi_reduction <add>, %12, %cst_12 [1] : vector<2x8x288xf32> to vector<2x288xf32>
    %cst_13 = arith.constant 0.353553385 : f32
    %14 = vector.broadcast %cst_13 : f32 to vector<2x288xf32>
    %15 = arith.mulf %13, %14 : vector<2x288xf32>
    %c0_14 = arith.constant 0 : index
    %c0_15 = arith.constant 0 : index
    %c18 = arith.constant 18 : index
    %16 = vector.load %arg2[%c0_14, %c0_15, %c18] : memref<2x8x342xf32, #tpu.memory_space<vmem>>, vector<2x8x288xf32>
    %17 = arith.mulf %0, %16 : vector<2x8x288xf32>
    %cst_16 = arith.constant dense<0.000000e+00> : vector<2x288xf32>
    %18 = vector.multi_reduction <add>, %17, %cst_16 [1] : vector<2x8x288xf32> to vector<2x288xf32>
    %cst_17 = arith.constant 0.353553385 : f32
    %19 = vector.broadcast %cst_17 : f32 to vector<2x288xf32>
    %20 = arith.mulf %18, %19 : vector<2x288xf32>
    %c0_18 = arith.constant 0 : index
    %c0_19 = arith.constant 0 : index
    %c19 = arith.constant 19 : index
    %21 = vector.load %arg2[%c0_18, %c0_19, %c19] : memref<2x8x342xf32, #tpu.memory_space<vmem>>, vector<2x8x288xf32>
    %22 = arith.mulf %0, %21 : vector<2x8x288xf32>
    %cst_20 = arith.constant dense<0.000000e+00> : vector<2x288xf32>
    %23 = vector.multi_reduction <add>, %22, %cst_20 [1] : vector<2x8x288xf32> to vector<2x288xf32>
    %cst_21 = arith.constant 0.353553385 : f32
    %24 = vector.broadcast %cst_21 : f32 to vector<2x288xf32>
    %25 = arith.mulf %23, %24 : vector<2x288xf32>
    %c0_22 = arith.constant 0 : index
    %c0_23 = arith.constant 0 : index
    %c20 = arith.constant 20 : index
    %26 = vector.load %arg2[%c0_22, %c0_23, %c20] : memref<2x8x342xf32, #tpu.memory_space<vmem>>, vector<2x8x288xf32>
    %27 = arith.mulf %0, %26 : vector<2x8x288xf32>
    %cst_24 = arith.constant dense<0.000000e+00> : vector<2x288xf32>
    %28 = vector.multi_reduction <add>, %27, %cst_24 [1] : vector<2x8x288xf32> to vector<2x288xf32>
    %cst_25 = arith.constant 0.353553385 : f32
    %29 = vector.broadcast %cst_25 : f32 to vector<2x288xf32>
    %30 = arith.mulf %28, %29 : vector<2x288xf32>
    %c0_26 = arith.constant 0 : index
    %c0_27 = arith.constant 0 : index
    %c36 = arith.constant 36 : index
    %31 = vector.load %arg2[%c0_26, %c0_27, %c36] : memref<2x8x342xf32, #tpu.memory_space<vmem>>, vector<2x8x288xf32>
    %32 = arith.mulf %0, %31 : vector<2x8x288xf32>
    %cst_28 = arith.constant dense<0.000000e+00> : vector<2x288xf32>
    %33 = vector.multi_reduction <add>, %32, %cst_28 [1] : vector<2x8x288xf32> to vector<2x288xf32>
    %cst_29 = arith.constant 0.353553385 : f32
    %34 = vector.broadcast %cst_29 : f32 to vector<2x288xf32>
    %35 = arith.mulf %33, %34 : vector<2x288xf32>
    %c0_30 = arith.constant 0 : index
    %c0_31 = arith.constant 0 : index
    %c37 = arith.constant 37 : index
    %36 = vector.load %arg2[%c0_30, %c0_31, %c37] : memref<2x8x342xf32, #tpu.memory_space<vmem>>, vector<2x8x288xf32>
    %37 = arith.mulf %0, %36 : vector<2x8x288xf32>
    %cst_32 = arith.constant dense<0.000000e+00> : vector<2x288xf32>
    %38 = vector.multi_reduction <add>, %37, %cst_32 [1] : vector<2x8x288xf32> to vector<2x288xf32>
    %cst_33 = arith.constant 0.353553385 : f32
    %39 = vector.broadcast %cst_33 : f32 to vector<2x288xf32>
    %40 = arith.mulf %38, %39 : vector<2x288xf32>
    %c0_34 = arith.constant 0 : index
    %c0_35 = arith.constant 0 : index
    %c38 = arith.constant 38 : index
    %41 = vector.load %arg2[%c0_34, %c0_35, %c38] : memref<2x8x342xf32, #tpu.memory_space<vmem>>, vector<2x8x288xf32>
    %42 = arith.mulf %0, %41 : vector<2x8x288xf32>
    %cst_36 = arith.constant dense<0.000000e+00> : vector<2x288xf32>
    %43 = vector.multi_reduction <add>, %42, %cst_36 [1] : vector<2x8x288xf32> to vector<2x288xf32>
    %cst_37 = arith.constant 0.353553385 : f32
    %44 = vector.broadcast %cst_37 : f32 to vector<2x288xf32>
    %45 = arith.mulf %43, %44 : vector<2x288xf32>
    %46 = arith.maximumf %5, %10 : vector<2x288xf32>
    %47 = arith.maximumf %46, %15 : vector<2x288xf32>
    %48 = arith.maximumf %47, %20 : vector<2x288xf32>
    %49 = arith.maximumf %48, %25 : vector<2x288xf32>
    %50 = arith.maximumf %49, %30 : vector<2x288xf32>
    %51 = arith.maximumf %50, %35 : vector<2x288xf32>
    %52 = arith.maximumf %51, %40 : vector<2x288xf32>
    %53 = arith.maximumf %52, %45 : vector<2x288xf32>
    %cst_38 = arith.constant 0.000000e+00 : f32
    %54 = vector.broadcast %cst_38 : f32 to vector<2x288xf32>
    %cst_39 = arith.constant 0.000000e+00 : f32
    %55 = vector.broadcast %cst_39 : f32 to vector<2x8x288xf32>
    %56 = arith.subf %5, %53 : vector<2x288xf32>
    %57 = math.exp %56 : vector<2x288xf32>
    %58 = arith.addf %54, %57 : vector<2x288xf32>
    %c0_40 = arith.constant 0 : index
    %c0_41 = arith.constant 0 : index
    %c0_42 = arith.constant 0 : index
    %59 = vector.load %arg3[%c0_40, %c0_41, %c0_42] : memref<2x8x342xf32, #tpu.memory_space<vmem>>, vector<2x8x288xf32>
    %60 = vector.shape_cast %57 : vector<2x288xf32> to vector<2x1x288xf32>
    %61 = vector.broadcast %60 : vector<2x1x288xf32> to vector<2x8x288xf32>
    %62 = arith.mulf %61, %59 : vector<2x8x288xf32>
    %63 = arith.addf %55, %62 : vector<2x8x288xf32>
    %64 = arith.subf %10, %53 : vector<2x288xf32>
    %65 = math.exp %64 : vector<2x288xf32>
    %66 = arith.addf %58, %65 : vector<2x288xf32>
    %c0_43 = arith.constant 0 : index
    %c0_44 = arith.constant 0 : index
    %c1_45 = arith.constant 1 : index
    %67 = vector.load %arg3[%c0_43, %c0_44, %c1_45] : memref<2x8x342xf32, #tpu.memory_space<vmem>>, vector<2x8x288xf32>
    %68 = vector.shape_cast %65 : vector<2x288xf32> to vector<2x1x288xf32>
    %69 = vector.broadcast %68 : vector<2x1x288xf32> to vector<2x8x288xf32>
    %70 = arith.mulf %69, %67 : vector<2x8x288xf32>
    %71 = arith.addf %63, %70 : vector<2x8x288xf32>
    %72 = arith.subf %15, %53 : vector<2x288xf32>
    %73 = math.exp %72 : vector<2x288xf32>
    %74 = arith.addf %66, %73 : vector<2x288xf32>
    %c0_46 = arith.constant 0 : index
    %c0_47 = arith.constant 0 : index
    %c2_48 = arith.constant 2 : index
    %75 = vector.load %arg3[%c0_46, %c0_47, %c2_48] : memref<2x8x342xf32, #tpu.memory_space<vmem>>, vector<2x8x288xf32>
    %76 = vector.shape_cast %73 : vector<2x288xf32> to vector<2x1x288xf32>
    %77 = vector.broadcast %76 : vector<2x1x288xf32> to vector<2x8x288xf32>
    %78 = arith.mulf %77, %75 : vector<2x8x288xf32>
    %79 = arith.addf %71, %78 : vector<2x8x288xf32>
    %80 = arith.subf %20, %53 : vector<2x288xf32>
    %81 = math.exp %80 : vector<2x288xf32>
    %82 = arith.addf %74, %81 : vector<2x288xf32>
    %c0_49 = arith.constant 0 : index
    %c0_50 = arith.constant 0 : index
    %c18_51 = arith.constant 18 : index
    %83 = vector.load %arg3[%c0_49, %c0_50, %c18_51] : memref<2x8x342xf32, #tpu.memory_space<vmem>>, vector<2x8x288xf32>
    %84 = vector.shape_cast %81 : vector<2x288xf32> to vector<2x1x288xf32>
    %85 = vector.broadcast %84 : vector<2x1x288xf32> to vector<2x8x288xf32>
    %86 = arith.mulf %85, %83 : vector<2x8x288xf32>
    %87 = arith.addf %79, %86 : vector<2x8x288xf32>
    %88 = arith.subf %25, %53 : vector<2x288xf32>
    %89 = math.exp %88 : vector<2x288xf32>
    %90 = arith.addf %82, %89 : vector<2x288xf32>
    %c0_52 = arith.constant 0 : index
    %c0_53 = arith.constant 0 : index
    %c19_54 = arith.constant 19 : index
    %91 = vector.load %arg3[%c0_52, %c0_53, %c19_54] : memref<2x8x342xf32, #tpu.memory_space<vmem>>, vector<2x8x288xf32>
    %92 = vector.shape_cast %89 : vector<2x288xf32> to vector<2x1x288xf32>
    %93 = vector.broadcast %92 : vector<2x1x288xf32> to vector<2x8x288xf32>
    %94 = arith.mulf %93, %91 : vector<2x8x288xf32>
    %95 = arith.addf %87, %94 : vector<2x8x288xf32>
    %96 = arith.subf %30, %53 : vector<2x288xf32>
    %97 = math.exp %96 : vector<2x288xf32>
    %98 = arith.addf %90, %97 : vector<2x288xf32>
    %c0_55 = arith.constant 0 : index
    %c0_56 = arith.constant 0 : index
    %c20_57 = arith.constant 20 : index
    %99 = vector.load %arg3[%c0_55, %c0_56, %c20_57] : memref<2x8x342xf32, #tpu.memory_space<vmem>>, vector<2x8x288xf32>
    %100 = vector.shape_cast %97 : vector<2x288xf32> to vector<2x1x288xf32>
    %101 = vector.broadcast %100 : vector<2x1x288xf32> to vector<2x8x288xf32>
    %102 = arith.mulf %101, %99 : vector<2x8x288xf32>
    %103 = arith.addf %95, %102 : vector<2x8x288xf32>
    %104 = arith.subf %35, %53 : vector<2x288xf32>
    %105 = math.exp %104 : vector<2x288xf32>
    %106 = arith.addf %98, %105 : vector<2x288xf32>
    %c0_58 = arith.constant 0 : index
    %c0_59 = arith.constant 0 : index
    %c36_60 = arith.constant 36 : index
    %107 = vector.load %arg3[%c0_58, %c0_59, %c36_60] : memref<2x8x342xf32, #tpu.memory_space<vmem>>, vector<2x8x288xf32>
    %108 = vector.shape_cast %105 : vector<2x288xf32> to vector<2x1x288xf32>
    %109 = vector.broadcast %108 : vector<2x1x288xf32> to vector<2x8x288xf32>
    %110 = arith.mulf %109, %107 : vector<2x8x288xf32>
    %111 = arith.addf %103, %110 : vector<2x8x288xf32>
    %112 = arith.subf %40, %53 : vector<2x288xf32>
    %113 = math.exp %112 : vector<2x288xf32>
    %114 = arith.addf %106, %113 : vector<2x288xf32>
    %c0_61 = arith.constant 0 : index
    %c0_62 = arith.constant 0 : index
    %c37_63 = arith.constant 37 : index
    %115 = vector.load %arg3[%c0_61, %c0_62, %c37_63] : memref<2x8x342xf32, #tpu.memory_space<vmem>>, vector<2x8x288xf32>
    %116 = vector.shape_cast %113 : vector<2x288xf32> to vector<2x1x288xf32>
    %117 = vector.broadcast %116 : vector<2x1x288xf32> to vector<2x8x288xf32>
    %118 = arith.mulf %117, %115 : vector<2x8x288xf32>
    %119 = arith.addf %111, %118 : vector<2x8x288xf32>
    %120 = arith.subf %45, %53 : vector<2x288xf32>
    %121 = math.exp %120 : vector<2x288xf32>
    %122 = arith.addf %114, %121 : vector<2x288xf32>
    %c0_64 = arith.constant 0 : index
    %c0_65 = arith.constant 0 : index
    %c38_66 = arith.constant 38 : index
    %123 = vector.load %arg3[%c0_64, %c0_65, %c38_66] : memref<2x8x342xf32, #tpu.memory_space<vmem>>, vector<2x8x288xf32>
    %124 = vector.shape_cast %121 : vector<2x288xf32> to vector<2x1x288xf32>
    %125 = vector.broadcast %124 : vector<2x1x288xf32> to vector<2x8x288xf32>
    %126 = arith.mulf %125, %123 : vector<2x8x288xf32>
    %127 = arith.addf %119, %126 : vector<2x8x288xf32>
    %128 = tpu.reciprocal %122 : vector<2x288xf32> -> vector<2x288xf32>
    %129 = vector.shape_cast %128 : vector<2x288xf32> to vector<2x1x288xf32>
    %130 = vector.broadcast %129 : vector<2x1x288xf32> to vector<2x8x288xf32>
    %131 = arith.mulf %127, %130 : vector<2x8x288xf32>
    %c0_67 = arith.constant 0 : index
    %c0_68 = arith.constant 0 : index
    %c0_69 = arith.constant 0 : index
    %132 = vector.load %arg4[%c0_67, %c0_68, %c0_69] : memref<2x8x288xf32, #tpu.memory_space<vmem>>, vector<2x8x288xf32>
    tpu.vector_store %arg4[%c0_67, %c0_68, %c0_69], %131 {strides = array<i32>} : memref<2x8x288xf32, #tpu.memory_space<vmem>>, vector<2x8x288xf32>,
    return
  }
  func.func @transform_0(%arg0: i32) -> (i32, i32, i32) {
    %c0_i32 = arith.constant 0 : i32
    %c0_i32_0 = arith.constant 0 : i32
    %c0_i32_1 = arith.constant 0 : i32
    return %arg0, %c0_i32, %c0_i32_0 : i32, i32, i32
  }
  func.func @transform_1(%arg0: i32) -> (i32, i32, i32) {
    %c0_i32 = arith.constant 0 : i32
    %c0_i32_0 = arith.constant 0 : i32
    %c0_i32_1 = arith.constant 0 : i32
    return %arg0, %c0_i32, %c0_i32_0 : i32, i32, i32
  }
  func.func @transform_2(%arg0: i32) -> (i32, i32, i32) {
    %c0_i32 = arith.constant 0 : i32
    %c0_i32_0 = arith.constant 0 : i32
    %c0_i32_1 = arith.constant 0 : i32
    return %arg0, %c0_i32, %c0_i32_0 : i32, i32, i32
  }
  func.func @transform_3(%arg0: i32) -> (i32, i32, i32) {
    %c0_i32 = arith.constant 0 : i32
    %c0_i32_0 = arith.constant 0 : i32
    %c0_i32_1 = arith.constant 0 : i32
    return %arg0, %c0_i32, %c0_i32_0 : i32, i32, i32
  }
}

</mosaic_0001>

<llo_original>
// kernel: tpu_custom_call.1
$region0: #{tpu_custom_call.1}
  #allocation0 [shape = 'u32[]', space=smem, size = 0x4, offset = 0x4, fixed_abs, tag = 'smem constant byte address 0x4 - core index']
  #allocation1 [shape = 'u32[144,128]{1,0:T(1,128)}', space=vmem, size = 0x12000, scoped, tag = 'internal scratch']
  %s0 = inlined_call_operand.hbm [shape: f32[4,8,288], index: 0, kind: input, shape index: {}]
  %s1 = inlined_call_operand.hbm [shape: f32[4,8,342], index: 1, kind: input, shape index: {}]
  %s2 = inlined_call_operand.hbm [shape: f32[4,8,342], index: 2, kind: input, shape index: {}]
  %s3 = inlined_call_operand.hbm [shape: f32[4,8,288], index: 3, kind: output, shape index: {}]
  %s4 = sld [smem:[#allocation0]]
  $region57: #{tpu_custom_call.1} parent=0
    _
  %s6 = ssub.s32 1, %s4
  %s7 = scalar_select 0, %s6, %s4
  $region1: #{tpu_custom_call.1} parent=0
    #allocation2 [shape = 'u8[49152]{0}', space=vmem, size = 0xc000, scoped, tag = 'input window, operand 0']
    #allocation3 [shape = 's32[2]{0}', space=sflag, size = 0x8, scoped, tag = 'scoped memory for tpu_custom_call.1']
    #allocation4 [shape = 's32[2]{0}', space=sflag, size = 0x8, scoped, tag = 'scoped memory for tpu_custom_call.1']
    #allocation5 [shape = 'u8[49152]{0}', space=vmem, size = 0xc000, scoped, tag = 'input window, operand 1']
    #allocation6 [shape = 's32[2]{0}', space=sflag, size = 0x8, scoped, tag = 'scoped memory for tpu_custom_call.1']
    #allocation7 [shape = 'u8[49152]{0}', space=vmem, size = 0xc000, scoped, tag = 'input window, operand 2']
    #allocation8 [shape = 'u8[49152]{0}', space=vmem, size = 0xc000, scoped, tag = 'output window, operand 0']
    %8 = vsyncpa [#allocation3], 0
    %s9 = scalar_lea.sflag [#allocation3], 1
    %10 = vsyncpa %s9, 0
    %11 = vsyncpa [#allocation6], 0
    %s12 = scalar_lea.sflag [#allocation6], 1
    %13 = vsyncpa %s12, 0
    %14 = vsyncpa [#allocation4], 0
    %s15 = scalar_lea.sflag [#allocation4], 1
    %16 = vsyncpa %s15, 0
    loop: start=0, step=1, limit=4
    $region2: #{tpu_custom_call.1} parent=1 // loop_pre_header
      _
    $region3: #{tpu_custom_call.1} parent=1 // loop_header
      %s18 = sphi 0, %s22
      %p19 = scmp.ge.s32.totalorder %s18, 4
      %s28 = sphi 0, %s30
      %s31 = sphi 0, %s28
      %s32 = sphi 0, %s31
      %s48 = sphi 0, %s32
      %s54 = sphi 0, %s56
      %s57 = sphi 0, %s54
      %s58 = sphi 0, %s57
      %s74 = sphi 0, %s58
      %s80 = sphi 0, %s82
      %s83 = sphi 0, %s80
      %s84 = sphi 0, %s83
      %s100 = sphi 0, %s84
      %s106 = sphi 0, %s108
      %s109 = sphi 0, %s106
      %s110 = sphi 0, %s109
      %s126 = sphi 0, %s110
    $region4: #{tpu_custom_call.1} parent=1 // loop_header_branch
      %21 = sbr.rel (%p19) target = $region8
    $region5: #{tpu_custom_call.1} parent=1 // loop_body
      %s23 = ssub.s32 %s18, 1
      %s24 = ssub.s32 %s18, 2
      %s25 = sadd.s32 %s18, 1
      %s26 = ssub.s32 %s18, %s25
      %p27 = scmp.eq.s32.totalorder %s26, 0
      %s29 = sadd.s32 %s28, 1
      %s30 = scalar_select %p27, %s28, %s29
      %p33 = pneg %p27
      %p34 = scmp.eq.s32.totalorder %s18, 1
      %p35 = por %p33, %p34
      %p36 = scmp.ne.s32.totalorder %s28, %s31
      %p37 = scmp.eq.s32.totalorder %s18, 0
      %p38 = por %p36, %p37
      %p39 = scmp.ne.s32.totalorder %s28, %s31
      %p40 = scmp.eq.s32.totalorder %s23, 1
      %p41 = por %p39, %p40
      %p42 = scmp.ne.s32.totalorder %s31, %s32
      %p43 = scmp.eq.s32.totalorder %s23, 0
      %p44 = por %p42, %p43
      %p45 = scmp.ne.s32.totalorder %s31, %s32
      %p46 = scmp.eq.s32.totalorder %s24, 1
      %p47 = por %p45, %p46
      %p49 = scmp.ne.s32.totalorder %s32, %s48
      %p50 = scmp.eq.s32.totalorder %s24, 0
      %p51 = por %p49, %p50
      %s52 = ssub.s32 %s18, %s25
      %p53 = scmp.eq.s32.totalorder %s52, 0
      %s55 = sadd.s32 %s54, 1
      %s56 = scalar_select %p53, %s54, %s55
      %p59 = pneg %p53
      %p60 = scmp.eq.s32.totalorder %s18, 1
      %p61 = por %p59, %p60
      %p62 = scmp.ne.s32.totalorder %s54, %s57
      %p63 = scmp.eq.s32.totalorder %s18, 0
      %p64 = por %p62, %p63
      %p65 = scmp.ne.s32.totalorder %s54, %s57
      %p66 = scmp.eq.s32.totalorder %s23, 1
      %p67 = por %p65, %p66
      %p68 = scmp.ne.s32.totalorder %s57, %s58
      %p69 = scmp.eq.s32.totalorder %s23, 0
      %p70 = por %p68, %p69
      %p71 = scmp.ne.s32.totalorder %s57, %s58
      %p72 = scmp.eq.s32.totalorder %s24, 1
      %p73 = por %p71, %p72
      %p75 = scmp.ne.s32.totalorder %s58, %s74
      %p76 = scmp.eq.s32.totalorder %s24, 0
      %p77 = por %p75, %p76
      %s78 = ssub.s32 %s18, %s25
      %p79 = scmp.eq.s32.totalorder %s78, 0
      %s81 = sadd.s32 %s80, 1
      %s82 = scalar_select %p79, %s80, %s81
      %p85 = pneg %p79
      %p86 = scmp.eq.s32.totalorder %s18, 1
      %p87 = por %p85, %p86
      %p88 = scmp.ne.s32.totalorder %s80, %s83
      %p89 = scmp.eq.s32.totalorder %s18, 0
      %p90 = por %p88, %p89
      %p91 = scmp.ne.s32.totalorder %s80, %s83
      %p92 = scmp.eq.s32.totalorder %s23, 1
      %p93 = por %p91, %p92
      %p94 = scmp.ne.s32.totalorder %s83, %s84
      %p95 = scmp.eq.s32.totalorder %s23, 0
      %p96 = por %p94, %p95
      %p97 = scmp.ne.s32.totalorder %s83, %s84
      %p98 = scmp.eq.s32.totalorder %s24, 1
      %p99 = por %p97, %p98
      %p101 = scmp.ne.s32.totalorder %s84, %s100
      %p102 = scmp.eq.s32.totalorder %s24, 0
      %p103 = por %p101, %p102
      %s104 = ssub.s32 %s18, %s25
      %p105 = scmp.eq.s32.totalorder %s104, 0
      %s107 = sadd.s32 %s106, 1
      %s108 = scalar_select %p105, %s106, %s107
      %p111 = pneg %p105
      %p112 = scmp.eq.s32.totalorder %s18, 1
      %p113 = por %p111, %p112
      %p114 = scmp.ne.s32.totalorder %s106, %s109
      %p115 = scmp.eq.s32.totalorder %s18, 0
      %p116 = por %p114, %p115
      %p117 = scmp.ne.s32.totalorder %s106, %s109
      %p118 = scmp.eq.s32.totalorder %s23, 1
      %p119 = por %p117, %p118
      %p120 = scmp.ne.s32.totalorder %s109, %s110
      %p121 = scmp.eq.s32.totalorder %s23, 0
      %p122 = por %p120, %p121
      %p123 = scmp.ne.s32.totalorder %s109, %s110
      %p124 = scmp.eq.s32.totalorder %s24, 1
      %p125 = por %p123, %p124
      %p127 = scmp.ne.s32.totalorder %s110, %s126
      %p128 = scmp.eq.s32.totalorder %s24, 0
      %p129 = por %p127, %p128
      %p130 = scmp.le.s32.totalorder 1, %s18
      %p131 = scmp.lt.s32.totalorder %s18, 3
      %p132 = pnand %p130, %p131
      %p133 = pneg %p132
      // Predicated region
      $region9: #{tpu_custom_call.1} parent=5 // pred_check
        _
      $region10: #{tpu_custom_call.1} parent=5 // pred_check_branch
        %135 = sbr.rel (%p132) target = $region12
      $region11: #{tpu_custom_call.1} parent=5 // pred_region
        %s136 = ssub.s32 %s18, 1
      $region12: #{tpu_custom_call.1} parent=5 // pred_fallthru
        _
      %p137 = scmp.lt.s32.totalorder %s18, 2
      // Predicated region
      $region13: #{tpu_custom_call.1} parent=5 // pred_check
        %p138 = pneg %p137
      $region14: #{tpu_custom_call.1} parent=5 // pred_check_branch
        %140 = sbr.rel (%p138) target = $region16
      $region15: #{tpu_custom_call.1} parent=5 // pred_region
        // Predicated region
        $region17: #{tpu_custom_call.1} parent=15 // pred_check
          %p141 = pneg %p38
        $region18: #{tpu_custom_call.1} parent=15 // pred_check_branch
          %143 = sbr.rel (%p141) target = $region20
        $region19: #{tpu_custom_call.1} parent=15 // pred_region
          %s144 = sand.u32 %s28, 1
          %s145 = scalar_lea.sflag [#allocation3], %s144
          %s146 = sand.u32 %s28, 1
          %s147 = smul.addr %s146, 48
          %s148 = scalar_lea.vmem [#allocation2], %s147
          %s149 = smul.u32 2, %s18
          %s151 = ssub.s32 768, 768
          %152 = vsyncadd %s145, %s151
          %s153 = smul.addr %s149, 3
          %s154 = smul.addr %s153, 128
          %s155 = scalar_lea.hbm %s0, %s154
          %s156 = sshll.u32 %s148, 4
          %s157 = int_to_ptr.vmem [resolvable:$true] %s156
          %162 = dma.hbm_to_vmem [thread:$0]  %s155, 768, %s157, %s145, 384, 384, 24
        $region20: #{tpu_custom_call.1} parent=15 // pred_fallthru
          _
        // Predicated region
        $region21: #{tpu_custom_call.1} parent=15 // pred_check
          %p163 = pneg %p64
        $region22: #{tpu_custom_call.1} parent=15 // pred_check_branch
          %165 = sbr.rel (%p163) target = $region24
        $region23: #{tpu_custom_call.1} parent=15 // pred_region
          %s166 = sand.u32 %s18, 1
          %s167 = scalar_lea.sflag [#allocation6], %s166
          %s168 = sand.u32 %s54, 1
          %s169 = smul.addr %s168, 48
          %s170 = scalar_lea.vmem [#allocation5], %s169
          %s171 = smul.u32 2, %s18
          %s173 = ssub.s32 768, 768
          %174 = vsyncadd %s167, %s173
          %s175 = smul.addr %s171, 3
          %s176 = smul.addr %s175, 128
          %s177 = scalar_lea.hbm %s1, %s176
          %s178 = sshll.u32 %s170, 4
          %s179 = int_to_ptr.vmem [resolvable:$true] %s178
          %184 = dma.hbm_to_vmem [thread:$0]  %s177, 768, %s179, %s167, 384, 384, 24
        $region24: #{tpu_custom_call.1} parent=15 // pred_fallthru
          _
        // Predicated region
        $region25: #{tpu_custom_call.1} parent=15 // pred_check
          %p185 = pneg %p90
        $region26: #{tpu_custom_call.1} parent=15 // pred_check_branch
          %187 = sbr.rel (%p185) target = $region28
        $region27: #{tpu_custom_call.1} parent=15 // pred_region
          %s188 = sand.u32 %s18, 1
          %s189 = scalar_lea.sflag [#allocation6], %s188
          %s190 = sand.u32 %s80, 1
          %s191 = smul.addr %s190, 48
          %s192 = scalar_lea.vmem [#allocation7], %s191
          %s193 = smul.u32 2, %s18
          %s195 = ssub.s32 768, 768
          %196 = vsyncadd %s189, %s195
          %s197 = smul.addr %s193, 3
          %s198 = smul.addr %s197, 128
          %s199 = scalar_lea.hbm %s2, %s198
          %s200 = sshll.u32 %s192, 4
          %s201 = int_to_ptr.vmem [resolvable:$true] %s200
          %206 = dma.hbm_to_vmem [thread:$0]  %s199, 768, %s201, %s189, 384, 384, 24
        $region28: #{tpu_custom_call.1} parent=15 // pred_fallthru
          _
      $region16: #{tpu_custom_call.1} parent=5 // pred_fallthru
        _
      %p207 = scmp.le.s32.totalorder 1, %s18
      %p208 = scmp.lt.s32.totalorder %s18, 3
      %p209 = pnand %p207, %p208
      %p210 = pneg %p209
      // Predicated region
      $region29: #{tpu_custom_call.1} parent=5 // pred_check
        _
      $region30: #{tpu_custom_call.1} parent=5 // pred_check_branch
        %212 = sbr.rel (%p209) target = $region32
      $region31: #{tpu_custom_call.1} parent=5 // pred_region
        %s213 = ssub.s32 %s18, 1
        %s214 = sand.u32 %s31, 1
        %s215 = scalar_lea.sflag [#allocation3], %s214
        %s216 = sand.u32 %s31, 1
        %s217 = smul.addr %s216, 48
        %s218 = scalar_lea.vmem [#allocation2], %s217
        // Predicated region
        $region33: #{tpu_custom_call.1} parent=31 // pred_check
          %p219 = pneg %p44
        $region34: #{tpu_custom_call.1} parent=31 // pred_check_branch
          %221 = sbr.rel (%p219) target = $region36
        $region35: #{tpu_custom_call.1} parent=31 // pred_region
          %222 = dma.done %s215, 768
        $region36: #{tpu_custom_call.1} parent=31 // pred_fallthru
          _
        %s223 = sand.u32 %s23, 1
        %s224 = scalar_lea.sflag [#allocation6], %s223
        %s225 = sand.u32 %s57, 1
        %s226 = smul.addr %s225, 48
        %s227 = scalar_lea.vmem [#allocation5], %s226
        // Predicated region
        $region37: #{tpu_custom_call.1} parent=31 // pred_check
          %p228 = pneg %p70
        $region38: #{tpu_custom_call.1} parent=31 // pred_check_branch
          %230 = sbr.rel (%p228) target = $region40
        $region39: #{tpu_custom_call.1} parent=31 // pred_region
          %231 = dma.done %s224, 768
        $region40: #{tpu_custom_call.1} parent=31 // pred_fallthru
          _
        %s232 = sand.u32 %s23, 1
        %s233 = scalar_lea.sflag [#allocation6], %s232
        %s234 = sand.u32 %s83, 1
        %s235 = smul.addr %s234, 48
        %s236 = scalar_lea.vmem [#allocation7], %s235
        // Predicated region
        $region41: #{tpu_custom_call.1} parent=31 // pred_check
          %p237 = pneg %p96
        $region42: #{tpu_custom_call.1} parent=31 // pred_check_branch
          %239 = sbr.rel (%p237) target = $region44
        $region43: #{tpu_custom_call.1} parent=31 // pred_region
          %240 = dma.done %s233, 768
        $region44: #{tpu_custom_call.1} parent=31 // pred_fallthru
          _
        %s241 = sand.u32 %s31, 1
        %s242 = scalar_lea.sflag [#allocation3], %s241
        %s243 = sand.u32 %s31, 1
        %s244 = smul.addr %s243, 48
        %s245 = scalar_lea.vmem [#allocation2], %s244
        %p246 = pneg %p44
        %p247 = pneg %p41
        %s248 = sand.u32 %s23, 1
        %s249 = scalar_lea.sflag [#allocation6], %s248
        %s250 = sand.u32 %s57, 1
        %s251 = smul.addr %s250, 48
        %s252 = scalar_lea.vmem [#allocation5], %s251
        %p253 = pneg %p70
        %p254 = pneg %p67
        %s255 = sand.u32 %s23, 1
        %s256 = scalar_lea.sflag [#allocation6], %s255
        %s257 = sand.u32 %s83, 1
        %s258 = smul.addr %s257, 48
        %s259 = scalar_lea.vmem [#allocation7], %s258
        %p260 = pneg %p96
        %p261 = pneg %p93
        %p262 = pneg %p122
        %p263 = pneg %p119
        %s264 = sand.u32 %s109, 1
        %s265 = scalar_lea.sflag [#allocation4], %s264
        %s266 = sand.u32 %s109, 1
        %s267 = smul.addr %s266, 48
        %s268 = scalar_lea.vmem [#allocation8], %s267
        %s269 = smul.u32 2, %s23
        %s270 = smul.u32 2, %s23
        %s271 = smul.u32 2, %s23
        %s272 = smul.u32 2, %s23
        %v273 = vld [vmem:[%s218] sm:$0xff]
        %v274 = vld [vmem:[%s218 + $0x8] sm:$0xff]
        %v275 = vld [vmem:[%s218 + $0x10] sm:$0xff]
        %v276 = vld [vmem:[%s218 + $0x18] sm:$0xff]
        %v277 = vld [vmem:[%s218 + $0x20] sm:$0xff]
        %v278 = vld [vmem:[%s218 + $0x28] sm:$0xff]
        %v279 = vld [vmem:[%s227] sm:$0xff]
        %v280 = vld [vmem:[%s227 + $0x8] sm:$0xff]
        %v281 = vld [vmem:[%s227 + $0x10] sm:$0xff]
        %v282 = vld [vmem:[%s227 + $0x18] sm:$0xff]
        %v283 = vld [vmem:[%s227 + $0x20] sm:$0xff]
        %v284 = vld [vmem:[%s227 + $0x28] sm:$0xff]
        %v285 = vmul.f32 %v273, %v279
        %v286 = vmul.f32 %v274, %v280
        %v287 = vmul.f32 %v275, %v281
        %v288 = vmul.f32 %v276, %v282
        %v289 = vmul.f32 %v277, %v283
        %v290 = vmul.f32 %v278, %v284
        %v291 = vrot.slane %v285, 4
        %v292 = vadd.f32 %v285, %v291
        %v293 = vrot.slane %v292, 2
        %v294 = vadd.f32 %v292, %v293
        %v295 = vrot.slane %v294, 1
        %v296 = vadd.f32 %v294, %v295
        %v297 = vrot.slane %v286, 4
        %v298 = vadd.f32 %v286, %v297
        %v299 = vrot.slane %v298, 2
        %v300 = vadd.f32 %v298, %v299
        %v301 = vrot.slane %v300, 1
        %v302 = vadd.f32 %v300, %v301
        %vm303 = vcmask 261120
        %v304 = vsel %vm303, %v287, 0.0
        %v305 = vrot.slane %v304, 4
        %v306 = vadd.f32 %v304, %v305
        %v307 = vrot.slane %v306, 2
        %v308 = vadd.f32 %v306, %v307
        %v309 = vrot.slane %v308, 1
        %v310 = vadd.f32 %v308, %v309
        %v311 = vrot.slane %v288, 4
        %v312 = vadd.f32 %v288, %v311
        %v313 = vrot.slane %v312, 2
        %v314 = vadd.f32 %v312, %v313
        %v315 = vrot.slane %v314, 1
        %v316 = vadd.f32 %v314, %v315
        %v317 = vrot.slane %v289, 4
        %v318 = vadd.f32 %v289, %v317
        %v319 = vrot.slane %v318, 2
        %v320 = vadd.f32 %v318, %v319
        %v321 = vrot.slane %v320, 1
        %v322 = vadd.f32 %v320, %v321
        %v323 = vsel %vm303, %v290, 0.0
        %v324 = vrot.slane %v323, 4
        %v325 = vadd.f32 %v323, %v324
        %v326 = vrot.slane %v325, 2
        %v327 = vadd.f32 %v325, %v326
        %v328 = vrot.slane %v327, 1
        %v329 = vadd.f32 %v327, %v328
        %v330 = vmul.f32 %v296, 0.35355338
        %v331 = vmul.f32 %v302, 0.35355338
        %v332 = vmul.f32 %v310, 0.35355338
        %v333 = vmul.f32 %v316, 0.35355338
        %v334 = vmul.f32 %v322, 0.35355338
        %v335 = vmul.f32 %v329, 0.35355338
        %342 = vrot.lane.b32.xlu0 %v279, 127
        %v343 = vpop.permute.xlu0 %342
        %344 = vrot.lane.b32.xlu0 %v280, 127
        %v345 = vpop.permute.xlu0 %344
        %346 = vrot.lane.b32.xlu0 %v281, 127
        %v347 = vpop.permute.xlu0 %346
        %348 = vrot.lane.b32.xlu0 %v282, 127
        %v349 = vpop.permute.xlu0 %348
        %350 = vrot.lane.b32.xlu0 %v283, 127
        %v351 = vpop.permute.xlu0 %350
        %352 = vrot.lane.b32.xlu0 %v284, 127
        %v353 = vpop.permute.xlu0 %352
        %vm354 = vcmask 1039360
        %v355 = vsel %vm354, %v343, %v345
        %v356 = vsel %vm354, %v345, %v347
        %v357 = vsel %vm354, %v349, %v351
        %v358 = vsel %vm354, %v351, %v353
        %v365 = vmul.f32 %v273, %v355
        %v366 = vmul.f32 %v274, %v356
        %v367 = vmul.f32 %v275, %v347
        %v368 = vmul.f32 %v276, %v357
        %v369 = vmul.f32 %v277, %v358
        %v370 = vmul.f32 %v278, %v353
        %v371 = vrot.slane %v365, 4
        %v372 = vadd.f32 %v365, %v371
        %v373 = vrot.slane %v372, 2
        %v374 = vadd.f32 %v372, %v373
        %v375 = vrot.slane %v374, 1
        %v376 = vadd.f32 %v374, %v375
        %v377 = vrot.slane %v366, 4
        %v378 = vadd.f32 %v366, %v377
        %v379 = vrot.slane %v378, 2
        %v380 = vadd.f32 %v378, %v379
        %v381 = vrot.slane %v380, 1
        %v382 = vadd.f32 %v380, %v381
        %v383 = vsel %vm303, %v367, 0.0
        %v384 = vrot.slane %v383, 4
        %v385 = vadd.f32 %v383, %v384
        %v386 = vrot.slane %v385, 2
        %v387 = vadd.f32 %v385, %v386
        %v388 = vrot.slane %v387, 1
        %v389 = vadd.f32 %v387, %v388
        %v390 = vrot.slane %v368, 4
        %v391 = vadd.f32 %v368, %v390
        %v392 = vrot.slane %v391, 2
        %v393 = vadd.f32 %v391, %v392
        %v394 = vrot.slane %v393, 1
        %v395 = vadd.f32 %v393, %v394
        %v396 = vrot.slane %v369, 4
        %v397 = vadd.f32 %v369, %v396
        %v398 = vrot.slane %v397, 2
        %v399 = vadd.f32 %v397, %v398
        %v400 = vrot.slane %v399, 1
        %v401 = vadd.f32 %v399, %v400
        %v402 = vsel %vm303, %v370, 0.0
        %v403 = vrot.slane %v402, 4
        %v404 = vadd.f32 %v402, %v403
        %v405 = vrot.slane %v404, 2
        %v406 = vadd.f32 %v404, %v405
        %v407 = vrot.slane %v406, 1
        %v408 = vadd.f32 %v406, %v407
        %v409 = vmul.f32 %v376, 0.35355338
        %v410 = vmul.f32 %v382, 0.35355338
        %v411 = vmul.f32 %v389, 0.35355338
        %v412 = vmul.f32 %v395, 0.35355338
        %v413 = vmul.f32 %v401, 0.35355338
        %v414 = vmul.f32 %v408, 0.35355338
        %415 = vrot.lane.b32.xlu0 %v279, 126
        %v416 = vpop.permute.xlu0 %415
        %417 = vrot.lane.b32.xlu0 %v280, 126
        %v418 = vpop.permute.xlu0 %417
        %419 = vrot.lane.b32.xlu0 %v281, 126
        %v420 = vpop.permute.xlu0 %419
        %421 = vrot.lane.b32.xlu0 %v282, 126
        %v422 = vpop.permute.xlu0 %421
        %423 = vrot.lane.b32.xlu0 %v283, 126
        %v424 = vpop.permute.xlu0 %423
        %425 = vrot.lane.b32.xlu0 %v284, 126
        %v426 = vpop.permute.xlu0 %425
        %vm427 = vcmask 1031168
        %v428 = vsel %vm427, %v416, %v418
        %v429 = vsel %vm427, %v418, %v420
        %v430 = vsel %vm427, %v422, %v424
        %v431 = vsel %vm427, %v424, %v426
        %v438 = vmul.f32 %v273, %v428
        %v439 = vmul.f32 %v274, %v429
        %v440 = vmul.f32 %v275, %v420
        %v441 = vmul.f32 %v276, %v430
        %v442 = vmul.f32 %v277, %v431
        %v443 = vmul.f32 %v278, %v426
        %v444 = vrot.slane %v438, 4
        %v445 = vadd.f32 %v438, %v444
        %v446 = vrot.slane %v445, 2
        %v447 = vadd.f32 %v445, %v446
        %v448 = vrot.slane %v447, 1
        %v449 = vadd.f32 %v447, %v448
        %v450 = vrot.slane %v439, 4
        %v451 = vadd.f32 %v439, %v450
        %v452 = vrot.slane %v451, 2
        %v453 = vadd.f32 %v451, %v452
        %v454 = vrot.slane %v453, 1
        %v455 = vadd.f32 %v453, %v454
        %v456 = vsel %vm303, %v440, 0.0
        %v457 = vrot.slane %v456, 4
        %v458 = vadd.f32 %v456, %v457
        %v459 = vrot.slane %v458, 2
        %v460 = vadd.f32 %v458, %v459
        %v461 = vrot.slane %v460, 1
        %v462 = vadd.f32 %v460, %v461
        %v463 = vrot.slane %v441, 4
        %v464 = vadd.f32 %v441, %v463
        %v465 = vrot.slane %v464, 2
        %v466 = vadd.f32 %v464, %v465
        %v467 = vrot.slane %v466, 1
        %v468 = vadd.f32 %v466, %v467
        %v469 = vrot.slane %v442, 4
        %v470 = vadd.f32 %v442, %v469
        %v471 = vrot.slane %v470, 2
        %v472 = vadd.f32 %v470, %v471
        %v473 = vrot.slane %v472, 1
        %v474 = vadd.f32 %v472, %v473
        %v475 = vsel %vm303, %v443, 0.0
        %v476 = vrot.slane %v475, 4
        %v477 = vadd.f32 %v475, %v476
        %v478 = vrot.slane %v477, 2
        %v479 = vadd.f32 %v477, %v478
        %v480 = vrot.slane %v479, 1
        %v481 = vadd.f32 %v479, %v480
        %v482 = vmul.f32 %v449, 0.35355338
        %v483 = vmul.f32 %v455, 0.35355338
        %v484 = vmul.f32 %v462, 0.35355338
        %v485 = vmul.f32 %v468, 0.35355338
        %v486 = vmul.f32 %v474, 0.35355338
        %v487 = vmul.f32 %v481, 0.35355338
        %488 = vrot.lane.b32.xlu0 %v279, 110
        %v489 = vpop.permute.xlu0 %488
        %490 = vrot.lane.b32.xlu0 %v280, 110
        %v491 = vpop.permute.xlu0 %490
        %492 = vrot.lane.b32.xlu0 %v281, 110
        %v493 = vpop.permute.xlu0 %492
        %494 = vrot.lane.b32.xlu0 %v282, 110
        %v495 = vpop.permute.xlu0 %494
        %496 = vrot.lane.b32.xlu0 %v283, 110
        %v497 = vpop.permute.xlu0 %496
        %498 = vrot.lane.b32.xlu0 %v284, 110
        %v499 = vpop.permute.xlu0 %498
        %vm500 = vcmask 900096
        %v501 = vsel %vm500, %v489, %v491
        %v502 = vsel %vm500, %v491, %v493
        %v503 = vsel %vm500, %v495, %v497
        %v504 = vsel %vm500, %v497, %v499
        %v511 = vmul.f32 %v273, %v501
        %v512 = vmul.f32 %v274, %v502
        %v513 = vmul.f32 %v275, %v493
        %v514 = vmul.f32 %v276, %v503
        %v515 = vmul.f32 %v277, %v504
        %v516 = vmul.f32 %v278, %v499
        %v517 = vrot.slane %v511, 4
        %v518 = vadd.f32 %v511, %v517
        %v519 = vrot.slane %v518, 2
        %v520 = vadd.f32 %v518, %v519
        %v521 = vrot.slane %v520, 1
        %v522 = vadd.f32 %v520, %v521
        %v523 = vrot.slane %v512, 4
        %v524 = vadd.f32 %v512, %v523
        %v525 = vrot.slane %v524, 2
        %v526 = vadd.f32 %v524, %v525
        %v527 = vrot.slane %v526, 1
        %v528 = vadd.f32 %v526, %v527
        %v529 = vsel %vm303, %v513, 0.0
        %v530 = vrot.slane %v529, 4
        %v531 = vadd.f32 %v529, %v530
        %v532 = vrot.slane %v531, 2
        %v533 = vadd.f32 %v531, %v532
        %v534 = vrot.slane %v533, 1
        %v535 = vadd.f32 %v533, %v534
        %v536 = vrot.slane %v514, 4
        %v537 = vadd.f32 %v514, %v536
        %v538 = vrot.slane %v537, 2
        %v539 = vadd.f32 %v537, %v538
        %v540 = vrot.slane %v539, 1
        %v541 = vadd.f32 %v539, %v540
        %v542 = vrot.slane %v515, 4
        %v543 = vadd.f32 %v515, %v542
        %v544 = vrot.slane %v543, 2
        %v545 = vadd.f32 %v543, %v544
        %v546 = vrot.slane %v545, 1
        %v547 = vadd.f32 %v545, %v546
        %v548 = vsel %vm303, %v516, 0.0
        %v549 = vrot.slane %v548, 4
        %v550 = vadd.f32 %v548, %v549
        %v551 = vrot.slane %v550, 2
        %v552 = vadd.f32 %v550, %v551
        %v553 = vrot.slane %v552, 1
        %v554 = vadd.f32 %v552, %v553
        %v555 = vmul.f32 %v522, 0.35355338
        %v556 = vmul.f32 %v528, 0.35355338
        %v557 = vmul.f32 %v535, 0.35355338
        %v558 = vmul.f32 %v541, 0.35355338
        %v559 = vmul.f32 %v547, 0.35355338
        %v560 = vmul.f32 %v554, 0.35355338
        %561 = vrot.lane.b32.xlu0 %v279, 109
        %v562 = vpop.permute.xlu0 %561
        %563 = vrot.lane.b32.xlu0 %v280, 109
        %v564 = vpop.permute.xlu0 %563
        %565 = vrot.lane.b32.xlu0 %v281, 109
        %v566 = vpop.permute.xlu0 %565
        %567 = vrot.lane.b32.xlu0 %v282, 109
        %v568 = vpop.permute.xlu0 %567
        %569 = vrot.lane.b32.xlu0 %v283, 109
        %v570 = vpop.permute.xlu0 %569
        %571 = vrot.lane.b32.xlu0 %v284, 109
        %v572 = vpop.permute.xlu0 %571
        %vm573 = vcmask 891904
        %v574 = vsel %vm573, %v562, %v564
        %v575 = vsel %vm573, %v564, %v566
        %v576 = vsel %vm573, %v568, %v570
        %v577 = vsel %vm573, %v570, %v572
        %v584 = vmul.f32 %v273, %v574
        %v585 = vmul.f32 %v274, %v575
        %v586 = vmul.f32 %v275, %v566
        %v587 = vmul.f32 %v276, %v576
        %v588 = vmul.f32 %v277, %v577
        %v589 = vmul.f32 %v278, %v572
        %v590 = vrot.slane %v584, 4
        %v591 = vadd.f32 %v584, %v590
        %v592 = vrot.slane %v591, 2
        %v593 = vadd.f32 %v591, %v592
        %v594 = vrot.slane %v593, 1
        %v595 = vadd.f32 %v593, %v594
        %v596 = vrot.slane %v585, 4
        %v597 = vadd.f32 %v585, %v596
        %v598 = vrot.slane %v597, 2
        %v599 = vadd.f32 %v597, %v598
        %v600 = vrot.slane %v599, 1
        %v601 = vadd.f32 %v599, %v600
        %v602 = vsel %vm303, %v586, 0.0
        %v603 = vrot.slane %v602, 4
        %v604 = vadd.f32 %v602, %v603
        %v605 = vrot.slane %v604, 2
        %v606 = vadd.f32 %v604, %v605
        %v607 = vrot.slane %v606, 1
        %v608 = vadd.f32 %v606, %v607
        %v609 = vrot.slane %v587, 4
        %v610 = vadd.f32 %v587, %v609
        %v611 = vrot.slane %v610, 2
        %v612 = vadd.f32 %v610, %v611
        %v613 = vrot.slane %v612, 1
        %v614 = vadd.f32 %v612, %v613
        %v615 = vrot.slane %v588, 4
        %v616 = vadd.f32 %v588, %v615
        %v617 = vrot.slane %v616, 2
        %v618 = vadd.f32 %v616, %v617
        %v619 = vrot.slane %v618, 1
        %v620 = vadd.f32 %v618, %v619
        %v621 = vsel %vm303, %v589, 0.0
        %v622 = vrot.slane %v621, 4
        %v623 = vadd.f32 %v621, %v622
        %v624 = vrot.slane %v623, 2
        %v625 = vadd.f32 %v623, %v624
        %v626 = vrot.slane %v625, 1
        %v627 = vadd.f32 %v625, %v626
        %v628 = vmul.f32 %v595, 0.35355338
        %v629 = vmul.f32 %v601, 0.35355338
        %v630 = vmul.f32 %v608, 0.35355338
        %v631 = vmul.f32 %v614, 0.35355338
        %v632 = vmul.f32 %v620, 0.35355338
        %v633 = vmul.f32 %v627, 0.35355338
        %634 = vrot.lane.b32.xlu0 %v279, 108
        %v635 = vpop.permute.xlu0 %634
        %636 = vrot.lane.b32.xlu0 %v280, 108
        %v637 = vpop.permute.xlu0 %636
        %638 = vrot.lane.b32.xlu0 %v281, 108
        %v639 = vpop.permute.xlu0 %638
        %640 = vrot.lane.b32.xlu0 %v282, 108
        %v641 = vpop.permute.xlu0 %640
        %642 = vrot.lane.b32.xlu0 %v283, 108
        %v643 = vpop.permute.xlu0 %642
        %644 = vrot.lane.b32.xlu0 %v284, 108
        %v645 = vpop.permute.xlu0 %644
        %vm646 = vcmask 883712
        %v647 = vsel %vm646, %v635, %v637
        %v648 = vsel %vm646, %v637, %v639
        %v649 = vsel %vm646, %v641, %v643
        %v650 = vsel %vm646, %v643, %v645
        %v657 = vmul.f32 %v273, %v647
        %v658 = vmul.f32 %v274, %v648
        %v659 = vmul.f32 %v275, %v639
        %v660 = vmul.f32 %v276, %v649
        %v661 = vmul.f32 %v277, %v650
        %v662 = vmul.f32 %v278, %v645
        %v663 = vrot.slane %v657, 4
        %v664 = vadd.f32 %v657, %v663
        %v665 = vrot.slane %v664, 2
        %v666 = vadd.f32 %v664, %v665
        %v667 = vrot.slane %v666, 1
        %v668 = vadd.f32 %v666, %v667
        %v669 = vrot.slane %v658, 4
        %v670 = vadd.f32 %v658, %v669
        %v671 = vrot.slane %v670, 2
        %v672 = vadd.f32 %v670, %v671
        %v673 = vrot.slane %v672, 1
        %v674 = vadd.f32 %v672, %v673
        %v675 = vsel %vm303, %v659, 0.0
        %v676 = vrot.slane %v675, 4
        %v677 = vadd.f32 %v675, %v676
        %v678 = vrot.slane %v677, 2
        %v679 = vadd.f32 %v677, %v678
        %v680 = vrot.slane %v679, 1
        %v681 = vadd.f32 %v679, %v680
        %v682 = vrot.slane %v660, 4
        %v683 = vadd.f32 %v660, %v682
        %v684 = vrot.slane %v683, 2
        %v685 = vadd.f32 %v683, %v684
        %v686 = vrot.slane %v685, 1
        %v687 = vadd.f32 %v685, %v686
        %v688 = vrot.slane %v661, 4
        %v689 = vadd.f32 %v661, %v688
        %v690 = vrot.slane %v689, 2
        %v691 = vadd.f32 %v689, %v690
        %v692 = vrot.slane %v691, 1
        %v693 = vadd.f32 %v691, %v692
        %v694 = vsel %vm303, %v662, 0.0
        %v695 = vrot.slane %v694, 4
        %v696 = vadd.f32 %v694, %v695
        %v697 = vrot.slane %v696, 2
        %v698 = vadd.f32 %v696, %v697
        %v699 = vrot.slane %v698, 1
        %v700 = vadd.f32 %v698, %v699
        %v701 = vmul.f32 %v668, 0.35355338
        %v702 = vmul.f32 %v674, 0.35355338
        %v703 = vmul.f32 %v681, 0.35355338
        %v704 = vmul.f32 %v687, 0.35355338
        %v705 = vmul.f32 %v693, 0.35355338
        %v706 = vmul.f32 %v700, 0.35355338
        %707 = vrot.lane.b32.xlu0 %v279, 92
        %v708 = vpop.permute.xlu0 %707
        %709 = vrot.lane.b32.xlu0 %v280, 92
        %v710 = vpop.permute.xlu0 %709
        %711 = vrot.lane.b32.xlu0 %v281, 92
        %v712 = vpop.permute.xlu0 %711
        %713 = vrot.lane.b32.xlu0 %v282, 92
        %v714 = vpop.permute.xlu0 %713
        %715 = vrot.lane.b32.xlu0 %v283, 92
        %v716 = vpop.permute.xlu0 %715
        %717 = vrot.lane.b32.xlu0 %v284, 92
        %v718 = vpop.permute.xlu0 %717
        %vm719 = vcmask 752640
        %v720 = vsel %vm719, %v708, %v710
        %v721 = vsel %vm719, %v710, %v712
        %v722 = vsel %vm719, %v714, %v716
        %v723 = vsel %vm719, %v716, %v718
        %v730 = vmul.f32 %v273, %v720
        %v731 = vmul.f32 %v274, %v721
        %v732 = vmul.f32 %v275, %v712
        %v733 = vmul.f32 %v276, %v722
        %v734 = vmul.f32 %v277, %v723
        %v735 = vmul.f32 %v278, %v718
        %v736 = vrot.slane %v730, 4
        %v737 = vadd.f32 %v730, %v736
        %v738 = vrot.slane %v737, 2
        %v739 = vadd.f32 %v737, %v738
        %v740 = vrot.slane %v739, 1
        %v741 = vadd.f32 %v739, %v740
        %v742 = vrot.slane %v731, 4
        %v743 = vadd.f32 %v731, %v742
        %v744 = vrot.slane %v743, 2
        %v745 = vadd.f32 %v743, %v744
        %v746 = vrot.slane %v745, 1
        %v747 = vadd.f32 %v745, %v746
        %v748 = vsel %vm303, %v732, 0.0
        %v749 = vrot.slane %v748, 4
        %v750 = vadd.f32 %v748, %v749
        %v751 = vrot.slane %v750, 2
        %v752 = vadd.f32 %v750, %v751
        %v753 = vrot.slane %v752, 1
        %v754 = vadd.f32 %v752, %v753
        %v755 = vrot.slane %v733, 4
        %v756 = vadd.f32 %v733, %v755
        %v757 = vrot.slane %v756, 2
        %v758 = vadd.f32 %v756, %v757
        %v759 = vrot.slane %v758, 1
        %v760 = vadd.f32 %v758, %v759
        %v761 = vrot.slane %v734, 4
        %v762 = vadd.f32 %v734, %v761
        %v763 = vrot.slane %v762, 2
        %v764 = vadd.f32 %v762, %v763
        %v765 = vrot.slane %v764, 1
        %v766 = vadd.f32 %v764, %v765
        %v767 = vsel %vm303, %v735, 0.0
        %v768 = vrot.slane %v767, 4
        %v769 = vadd.f32 %v767, %v768
        %v770 = vrot.slane %v769, 2
        %v771 = vadd.f32 %v769, %v770
        %v772 = vrot.slane %v771, 1
        %v773 = vadd.f32 %v771, %v772
        %v774 = vmul.f32 %v741, 0.35355338
        %v775 = vmul.f32 %v747, 0.35355338
        %v776 = vmul.f32 %v754, 0.35355338
        %v777 = vmul.f32 %v760, 0.35355338
        %v778 = vmul.f32 %v766, 0.35355338
        %v779 = vmul.f32 %v773, 0.35355338
        %780 = vrot.lane.b32.xlu0 %v279, 91
        %v781 = vpop.permute.xlu0 %780
        %782 = vrot.lane.b32.xlu0 %v280, 91
        %v783 = vpop.permute.xlu0 %782
        %784 = vrot.lane.b32.xlu0 %v281, 91
        %v785 = vpop.permute.xlu0 %784
        %786 = vrot.lane.b32.xlu0 %v282, 91
        %v787 = vpop.permute.xlu0 %786
        %788 = vrot.lane.b32.xlu0 %v283, 91
        %v789 = vpop.permute.xlu0 %788
        %790 = vrot.lane.b32.xlu0 %v284, 91
        %v791 = vpop.permute.xlu0 %790
        %vm792 = vcmask 744448
        %v793 = vsel %vm792, %v781, %v783
        %v794 = vsel %vm792, %v783, %v785
        %v795 = vsel %vm792, %v787, %v789
        %v796 = vsel %vm792, %v789, %v791
        %v803 = vmul.f32 %v273, %v793
        %v804 = vmul.f32 %v274, %v794
        %v805 = vmul.f32 %v275, %v785
        %v806 = vmul.f32 %v276, %v795
        %v807 = vmul.f32 %v277, %v796
        %v808 = vmul.f32 %v278, %v791
        %v809 = vrot.slane %v803, 4
        %v810 = vadd.f32 %v803, %v809
        %v811 = vrot.slane %v810, 2
        %v812 = vadd.f32 %v810, %v811
        %v813 = vrot.slane %v812, 1
        %v814 = vadd.f32 %v812, %v813
        %v815 = vrot.slane %v804, 4
        %v816 = vadd.f32 %v804, %v815
        %v817 = vrot.slane %v816, 2
        %v818 = vadd.f32 %v816, %v817
        %v819 = vrot.slane %v818, 1
        %v820 = vadd.f32 %v818, %v819
        %v821 = vsel %vm303, %v805, 0.0
        %v822 = vrot.slane %v821, 4
        %v823 = vadd.f32 %v821, %v822
        %v824 = vrot.slane %v823, 2
        %v825 = vadd.f32 %v823, %v824
        %v826 = vrot.slane %v825, 1
        %v827 = vadd.f32 %v825, %v826
        %v828 = vrot.slane %v806, 4
        %v829 = vadd.f32 %v806, %v828
        %v830 = vrot.slane %v829, 2
        %v831 = vadd.f32 %v829, %v830
        %v832 = vrot.slane %v831, 1
        %v833 = vadd.f32 %v831, %v832
        %v834 = vrot.slane %v807, 4
        %v835 = vadd.f32 %v807, %v834
        %v836 = vrot.slane %v835, 2
        %v837 = vadd.f32 %v835, %v836
        %v838 = vrot.slane %v837, 1
        %v839 = vadd.f32 %v837, %v838
        %v840 = vsel %vm303, %v808, 0.0
        %v841 = vrot.slane %v840, 4
        %v842 = vadd.f32 %v840, %v841
        %v843 = vrot.slane %v842, 2
        %v844 = vadd.f32 %v842, %v843
        %v845 = vrot.slane %v844, 1
        %v846 = vadd.f32 %v844, %v845
        %v847 = vmul.f32 %v814, 0.35355338
        %v848 = vmul.f32 %v820, 0.35355338
        %v849 = vmul.f32 %v827, 0.35355338
        %v850 = vmul.f32 %v833, 0.35355338
        %v851 = vmul.f32 %v839, 0.35355338
        %v852 = vmul.f32 %v846, 0.35355338
        %853 = vrot.lane.b32.xlu0 %v279, 90
        %v854 = vpop.permute.xlu0 %853
        %855 = vrot.lane.b32.xlu0 %v280, 90
        %v856 = vpop.permute.xlu0 %855
        %857 = vrot.lane.b32.xlu0 %v281, 90
        %v858 = vpop.permute.xlu0 %857
        %859 = vrot.lane.b32.xlu0 %v282, 90
        %v860 = vpop.permute.xlu0 %859
        %861 = vrot.lane.b32.xlu0 %v283, 90
        %v862 = vpop.permute.xlu0 %861
        %863 = vrot.lane.b32.xlu0 %v284, 90
        %v864 = vpop.permute.xlu0 %863
        %vm865 = vcmask 736256
        %v866 = vsel %vm865, %v854, %v856
        %v867 = vsel %vm865, %v856, %v858
        %v868 = vsel %vm865, %v860, %v862
        %v869 = vsel %vm865, %v862, %v864
        %v876 = vmul.f32 %v273, %v866
        %v877 = vmul.f32 %v274, %v867
        %v878 = vmul.f32 %v275, %v858
        %v879 = vmul.f32 %v276, %v868
        %v880 = vmul.f32 %v277, %v869
        %v881 = vmul.f32 %v278, %v864
        %v882 = vrot.slane %v876, 4
        %v883 = vadd.f32 %v876, %v882
        %v884 = vrot.slane %v883, 2
        %v885 = vadd.f32 %v883, %v884
        %v886 = vrot.slane %v885, 1
        %v887 = vadd.f32 %v885, %v886
        %v888 = vrot.slane %v877, 4
        %v889 = vadd.f32 %v877, %v888
        %v890 = vrot.slane %v889, 2
        %v891 = vadd.f32 %v889, %v890
        %v892 = vrot.slane %v891, 1
        %v893 = vadd.f32 %v891, %v892
        %v894 = vsel %vm303, %v878, 0.0
        %v895 = vrot.slane %v894, 4
        %v896 = vadd.f32 %v894, %v895
        %v897 = vrot.slane %v896, 2
        %v898 = vadd.f32 %v896, %v897
        %v899 = vrot.slane %v898, 1
        %v900 = vadd.f32 %v898, %v899
        %v901 = vrot.slane %v879, 4
        %v902 = vadd.f32 %v879, %v901
        %v903 = vrot.slane %v902, 2
        %v904 = vadd.f32 %v902, %v903
        %v905 = vrot.slane %v904, 1
        %v906 = vadd.f32 %v904, %v905
        %v907 = vrot.slane %v880, 4
        %v908 = vadd.f32 %v880, %v907
        %v909 = vrot.slane %v908, 2
        %v910 = vadd.f32 %v908, %v909
        %v911 = vrot.slane %v910, 1
        %v912 = vadd.f32 %v910, %v911
        %v913 = vsel %vm303, %v881, 0.0
        %v914 = vrot.slane %v913, 4
        %v915 = vadd.f32 %v913, %v914
        %v916 = vrot.slane %v915, 2
        %v917 = vadd.f32 %v915, %v916
        %v918 = vrot.slane %v917, 1
        %v919 = vadd.f32 %v917, %v918
        %v920 = vmul.f32 %v887, 0.35355338
        %v921 = vmul.f32 %v893, 0.35355338
        %v922 = vmul.f32 %v900, 0.35355338
        %v923 = vmul.f32 %v906, 0.35355338
        %v924 = vmul.f32 %v912, 0.35355338
        %v925 = vmul.f32 %v919, 0.35355338
        %v926 = vmax.f32 %v330, %v409
        %v927 = vmax.f32 %v331, %v410
        %v928 = vmax.f32 %v332, %v411
        %v929 = vmax.f32 %v333, %v412
        %v930 = vmax.f32 %v334, %v413
        %v931 = vmax.f32 %v335, %v414
        %v932 = vmax.f32 %v926, %v482
        %v933 = vmax.f32 %v927, %v483
        %v934 = vmax.f32 %v928, %v484
        %v935 = vmax.f32 %v929, %v485
        %v936 = vmax.f32 %v930, %v486
        %v937 = vmax.f32 %v931, %v487
        %v938 = vmax.f32 %v932, %v555
        %v939 = vmax.f32 %v933, %v556
        %v940 = vmax.f32 %v934, %v557
        %v941 = vmax.f32 %v935, %v558
        %v942 = vmax.f32 %v936, %v559
        %v943 = vmax.f32 %v937, %v560
        %v944 = vmax.f32 %v938, %v628
        %v945 = vmax.f32 %v939, %v629
        %v946 = vmax.f32 %v940, %v630
        %v947 = vmax.f32 %v941, %v631
        %v948 = vmax.f32 %v942, %v632
        %v949 = vmax.f32 %v943, %v633
        %v950 = vmax.f32 %v944, %v701
        %v951 = vmax.f32 %v945, %v702
        %v952 = vmax.f32 %v946, %v703
        %v953 = vmax.f32 %v947, %v704
        %v954 = vmax.f32 %v948, %v705
        %v955 = vmax.f32 %v949, %v706
        %v956 = vmax.f32 %v950, %v774
        %v957 = vmax.f32 %v951, %v775
        %v958 = vmax.f32 %v952, %v776
        %v959 = vmax.f32 %v953, %v777
        %v960 = vmax.f32 %v954, %v778
        %v961 = vmax.f32 %v955, %v779
        %v962 = vmax.f32 %v956, %v847
        %v963 = vmax.f32 %v957, %v848
        %v964 = vmax.f32 %v958, %v849
        %v965 = vmax.f32 %v959, %v850
        %v966 = vmax.f32 %v960, %v851
        %v967 = vmax.f32 %v961, %v852
        %v968 = vmax.f32 %v962, %v920
        %v969 = vmax.f32 %v963, %v921
        %v970 = vmax.f32 %v964, %v922
        %v971 = vmax.f32 %v965, %v923
        %v972 = vmax.f32 %v966, %v924
        %v973 = vmax.f32 %v967, %v925
        %v974 = vsub.f32 %v330, %v968
        %v975 = vsub.f32 %v331, %v969
        %v976 = vsub.f32 %v332, %v970
        %v977 = vsub.f32 %v333, %v971
        %v978 = vsub.f32 %v334, %v972
        %v979 = vsub.f32 %v335, %v973
        %v980 = vmul.f32 %v974, 1.442695
        %v981 = vpow.pop %v980
        %v982 = vmul.f32 %v975, 1.442695
        %v983 = vpow.pop %v982
        %v984 = vmul.f32 %v976, 1.442695
        %v985 = vpow.pop %v984
        %v986 = vmul.f32 %v977, 1.442695
        %v987 = vpow.pop %v986
        %v988 = vmul.f32 %v978, 1.442695
        %v989 = vpow.pop %v988
        %v990 = vmul.f32 %v979, 1.442695
        %v991 = vpow.pop %v990
        %v992 = vadd.f32 %v981, 0.0
        %v993 = vadd.f32 %v983, 0.0
        %v994 = vadd.f32 %v985, 0.0
        %v995 = vadd.f32 %v987, 0.0
        %v996 = vadd.f32 %v989, 0.0
        %v997 = vadd.f32 %v991, 0.0
        %v998 = vld [vmem:[%s236] sm:$0xff]
        %v999 = vld [vmem:[%s236 + $0x8] sm:$0xff]
        %v1000 = vld [vmem:[%s236 + $0x10] sm:$0xff]
        %v1001 = vld [vmem:[%s236 + $0x18] sm:$0xff]
        %v1002 = vld [vmem:[%s236 + $0x20] sm:$0xff]
        %v1003 = vld [vmem:[%s236 + $0x28] sm:$0xff]
        %v1004 = vmul.f32 %v981, %v998
        %v1005 = vmul.f32 %v983, %v999
        %v1006 = vmul.f32 %v985, %v1000
        %v1007 = vmul.f32 %v987, %v1001
        %v1008 = vmul.f32 %v989, %v1002
        %v1009 = vmul.f32 %v991, %v1003
        %v1010 = vadd.f32 %v1004, 0.0
        %v1011 = vadd.f32 %v1005, 0.0
        %v1012 = vadd.f32 %v1006, 0.0
        %v1013 = vadd.f32 %v1007, 0.0
        %v1014 = vadd.f32 %v1008, 0.0
        %v1015 = vadd.f32 %v1009, 0.0
        %v1016 = vsub.f32 %v409, %v968
        %v1017 = vsub.f32 %v410, %v969
        %v1018 = vsub.f32 %v411, %v970
        %v1019 = vsub.f32 %v412, %v971
        %v1020 = vsub.f32 %v413, %v972
        %v1021 = vsub.f32 %v414, %v973
        %v1022 = vmul.f32 %v1016, 1.442695
        %v1023 = vpow.pop %v1022
        %v1024 = vmul.f32 %v1017, 1.442695
        %v1025 = vpow.pop %v1024
        %v1026 = vmul.f32 %v1018, 1.442695
        %v1027 = vpow.pop %v1026
        %v1028 = vmul.f32 %v1019, 1.442695
        %v1029 = vpow.pop %v1028
        %v1030 = vmul.f32 %v1020, 1.442695
        %v1031 = vpow.pop %v1030
        %v1032 = vmul.f32 %v1021, 1.442695
        %v1033 = vpow.pop %v1032
        %v1034 = vadd.f32 %v992, %v1023
        %v1035 = vadd.f32 %v993, %v1025
        %v1036 = vadd.f32 %v994, %v1027
        %v1037 = vadd.f32 %v995, %v1029
        %v1038 = vadd.f32 %v996, %v1031
        %v1039 = vadd.f32 %v997, %v1033
        %1046 = vrot.lane.b32.xlu0 %v998, 127
        %v1047 = vpop.permute.xlu0 %1046
        %1048 = vrot.lane.b32.xlu0 %v999, 127
        %v1049 = vpop.permute.xlu0 %1048
        %1050 = vrot.lane.b32.xlu0 %v1000, 127
        %v1051 = vpop.permute.xlu0 %1050
        %1052 = vrot.lane.b32.xlu0 %v1001, 127
        %v1053 = vpop.permute.xlu0 %1052
        %1054 = vrot.lane.b32.xlu0 %v1002, 127
        %v1055 = vpop.permute.xlu0 %1054
        %1056 = vrot.lane.b32.xlu0 %v1003, 127
        %v1057 = vpop.permute.xlu0 %1056
        %v1058 = vsel %vm354, %v1047, %v1049
        %v1059 = vsel %vm354, %v1049, %v1051
        %v1060 = vsel %vm354, %v1053, %v1055
        %v1061 = vsel %vm354, %v1055, %v1057
        %v1068 = vmul.f32 %v1023, %v1058
        %v1069 = vmul.f32 %v1025, %v1059
        %v1070 = vmul.f32 %v1027, %v1051
        %v1071 = vmul.f32 %v1029, %v1060
        %v1072 = vmul.f32 %v1031, %v1061
        %v1073 = vmul.f32 %v1033, %v1057
        %v1074 = vadd.f32 %v1010, %v1068
        %v1075 = vadd.f32 %v1011, %v1069
        %v1076 = vadd.f32 %v1012, %v1070
        %v1077 = vadd.f32 %v1013, %v1071
        %v1078 = vadd.f32 %v1014, %v1072
        %v1079 = vadd.f32 %v1015, %v1073
        %v1080 = vsub.f32 %v482, %v968
        %v1081 = vsub.f32 %v483, %v969
        %v1082 = vsub.f32 %v484, %v970
        %v1083 = vsub.f32 %v485, %v971
        %v1084 = vsub.f32 %v486, %v972
        %v1085 = vsub.f32 %v487, %v973
        %v1086 = vmul.f32 %v1080, 1.442695
        %v1087 = vpow.pop %v1086
        %v1088 = vmul.f32 %v1081, 1.442695
        %v1089 = vpow.pop %v1088
        %v1090 = vmul.f32 %v1082, 1.442695
        %v1091 = vpow.pop %v1090
        %v1092 = vmul.f32 %v1083, 1.442695
        %v1093 = vpow.pop %v1092
        %v1094 = vmul.f32 %v1084, 1.442695
        %v1095 = vpow.pop %v1094
        %v1096 = vmul.f32 %v1085, 1.442695
        %v1097 = vpow.pop %v1096
        %v1098 = vadd.f32 %v1034, %v1087
        %v1099 = vadd.f32 %v1035, %v1089
        %v1100 = vadd.f32 %v1036, %v1091
        %v1101 = vadd.f32 %v1037, %v1093
        %v1102 = vadd.f32 %v1038, %v1095
        %v1103 = vadd.f32 %v1039, %v1097
        %1104 = vrot.lane.b32.xlu0 %v998, 126
        %v1105 = vpop.permute.xlu0 %1104
        %1106 = vrot.lane.b32.xlu0 %v999, 126
        %v1107 = vpop.permute.xlu0 %1106
        %1108 = vrot.lane.b32.xlu0 %v1000, 126
        %v1109 = vpop.permute.xlu0 %1108
        %1110 = vrot.lane.b32.xlu0 %v1001, 126
        %v1111 = vpop.permute.xlu0 %1110
        %1112 = vrot.lane.b32.xlu0 %v1002, 126
        %v1113 = vpop.permute.xlu0 %1112
        %1114 = vrot.lane.b32.xlu0 %v1003, 126
        %v1115 = vpop.permute.xlu0 %1114
        %v1116 = vsel %vm427, %v1105, %v1107
        %v1117 = vsel %vm427, %v1107, %v1109
        %v1118 = vsel %vm427, %v1111, %v1113
        %v1119 = vsel %vm427, %v1113, %v1115
        %v1126 = vmul.f32 %v1087, %v1116
        %v1127 = vmul.f32 %v1089, %v1117
        %v1128 = vmul.f32 %v1091, %v1109
        %v1129 = vmul.f32 %v1093, %v1118
        %v1130 = vmul.f32 %v1095, %v1119
        %v1131 = vmul.f32 %v1097, %v1115
        %v1132 = vadd.f32 %v1074, %v1126
        %v1133 = vadd.f32 %v1075, %v1127
        %v1134 = vadd.f32 %v1076, %v1128
        %v1135 = vadd.f32 %v1077, %v1129
        %v1136 = vadd.f32 %v1078, %v1130
        %v1137 = vadd.f32 %v1079, %v1131
        %v1138 = vsub.f32 %v555, %v968
        %v1139 = vsub.f32 %v556, %v969
        %v1140 = vsub.f32 %v557, %v970
        %v1141 = vsub.f32 %v558, %v971
        %v1142 = vsub.f32 %v559, %v972
        %v1143 = vsub.f32 %v560, %v973
        %v1144 = vmul.f32 %v1138, 1.442695
        %v1145 = vpow.pop %v1144
        %v1146 = vmul.f32 %v1139, 1.442695
        %v1147 = vpow.pop %v1146
        %v1148 = vmul.f32 %v1140, 1.442695
        %v1149 = vpow.pop %v1148
        %v1150 = vmul.f32 %v1141, 1.442695
        %v1151 = vpow.pop %v1150
        %v1152 = vmul.f32 %v1142, 1.442695
        %v1153 = vpow.pop %v1152
        %v1154 = vmul.f32 %v1143, 1.442695
        %v1155 = vpow.pop %v1154
        %v1156 = vadd.f32 %v1098, %v1145
        %v1157 = vadd.f32 %v1099, %v1147
        %v1158 = vadd.f32 %v1100, %v1149
        %v1159 = vadd.f32 %v1101, %v1151
        %v1160 = vadd.f32 %v1102, %v1153
        %v1161 = vadd.f32 %v1103, %v1155
        %1162 = vrot.lane.b32.xlu0 %v998, 110
        %v1163 = vpop.permute.xlu0 %1162
        %1164 = vrot.lane.b32.xlu0 %v999, 110
        %v1165 = vpop.permute.xlu0 %1164
        %1166 = vrot.lane.b32.xlu0 %v1000, 110
        %v1167 = vpop.permute.xlu0 %1166
        %1168 = vrot.lane.b32.xlu0 %v1001, 110
        %v1169 = vpop.permute.xlu0 %1168
        %1170 = vrot.lane.b32.xlu0 %v1002, 110
        %v1171 = vpop.permute.xlu0 %1170
        %1172 = vrot.lane.b32.xlu0 %v1003, 110
        %v1173 = vpop.permute.xlu0 %1172
        %v1174 = vsel %vm500, %v1163, %v1165
        %v1175 = vsel %vm500, %v1165, %v1167
        %v1176 = vsel %vm500, %v1169, %v1171
        %v1177 = vsel %vm500, %v1171, %v1173
        %v1184 = vmul.f32 %v1145, %v1174
        %v1185 = vmul.f32 %v1147, %v1175
        %v1186 = vmul.f32 %v1149, %v1167
        %v1187 = vmul.f32 %v1151, %v1176
        %v1188 = vmul.f32 %v1153, %v1177
        %v1189 = vmul.f32 %v1155, %v1173
        %v1190 = vadd.f32 %v1132, %v1184
        %v1191 = vadd.f32 %v1133, %v1185
        %v1192 = vadd.f32 %v1134, %v1186
        %v1193 = vadd.f32 %v1135, %v1187
        %v1194 = vadd.f32 %v1136, %v1188
        %v1195 = vadd.f32 %v1137, %v1189
        %v1196 = vsub.f32 %v628, %v968
        %v1197 = vsub.f32 %v629, %v969
        %v1198 = vsub.f32 %v630, %v970
        %v1199 = vsub.f32 %v631, %v971
        %v1200 = vsub.f32 %v632, %v972
        %v1201 = vsub.f32 %v633, %v973
        %v1202 = vmul.f32 %v1196, 1.442695
        %v1203 = vpow.pop %v1202
        %v1204 = vmul.f32 %v1197, 1.442695
        %v1205 = vpow.pop %v1204
        %v1206 = vmul.f32 %v1198, 1.442695
        %v1207 = vpow.pop %v1206
        %v1208 = vmul.f32 %v1199, 1.442695
        %v1209 = vpow.pop %v1208
        %v1210 = vmul.f32 %v1200, 1.442695
        %v1211 = vpow.pop %v1210
        %v1212 = vmul.f32 %v1201, 1.442695
        %v1213 = vpow.pop %v1212
        %v1214 = vadd.f32 %v1156, %v1203
        %v1215 = vadd.f32 %v1157, %v1205
        %v1216 = vadd.f32 %v1158, %v1207
        %v1217 = vadd.f32 %v1159, %v1209
        %v1218 = vadd.f32 %v1160, %v1211
        %v1219 = vadd.f32 %v1161, %v1213
        %1220 = vrot.lane.b32.xlu0 %v998, 109
        %v1221 = vpop.permute.xlu0 %1220
        %1222 = vrot.lane.b32.xlu0 %v999, 109
        %v1223 = vpop.permute.xlu0 %1222
        %1224 = vrot.lane.b32.xlu0 %v1000, 109
        %v1225 = vpop.permute.xlu0 %1224
        %1226 = vrot.lane.b32.xlu0 %v1001, 109
        %v1227 = vpop.permute.xlu0 %1226
        %1228 = vrot.lane.b32.xlu0 %v1002, 109
        %v1229 = vpop.permute.xlu0 %1228
        %1230 = vrot.lane.b32.xlu0 %v1003, 109
        %v1231 = vpop.permute.xlu0 %1230
        %v1232 = vsel %vm573, %v1221, %v1223
        %v1233 = vsel %vm573, %v1223, %v1225
        %v1234 = vsel %vm573, %v1227, %v1229
        %v1235 = vsel %vm573, %v1229, %v1231
        %v1242 = vmul.f32 %v1203, %v1232
        %v1243 = vmul.f32 %v1205, %v1233
        %v1244 = vmul.f32 %v1207, %v1225
        %v1245 = vmul.f32 %v1209, %v1234
        %v1246 = vmul.f32 %v1211, %v1235
        %v1247 = vmul.f32 %v1213, %v1231
        %v1248 = vadd.f32 %v1190, %v1242
        %v1249 = vadd.f32 %v1191, %v1243
        %v1250 = vadd.f32 %v1192, %v1244
        %v1251 = vadd.f32 %v1193, %v1245
        %v1252 = vadd.f32 %v1194, %v1246
        %v1253 = vadd.f32 %v1195, %v1247
        %v1254 = vsub.f32 %v701, %v968
        %v1255 = vsub.f32 %v702, %v969
        %v1256 = vsub.f32 %v703, %v970
        %v1257 = vsub.f32 %v704, %v971
        %v1258 = vsub.f32 %v705, %v972
        %v1259 = vsub.f32 %v706, %v973
        %v1260 = vmul.f32 %v1254, 1.442695
        %v1261 = vpow.pop %v1260
        %v1262 = vmul.f32 %v1255, 1.442695
        %v1263 = vpow.pop %v1262
        %v1264 = vmul.f32 %v1256, 1.442695
        %v1265 = vpow.pop %v1264
        %v1266 = vmul.f32 %v1257, 1.442695
        %v1267 = vpow.pop %v1266
        %v1268 = vmul.f32 %v1258, 1.442695
        %v1269 = vpow.pop %v1268
        %v1270 = vmul.f32 %v1259, 1.442695
        %v1271 = vpow.pop %v1270
        %v1272 = vadd.f32 %v1214, %v1261
        %v1273 = vadd.f32 %v1215, %v1263
        %v1274 = vadd.f32 %v1216, %v1265
        %v1275 = vadd.f32 %v1217, %v1267
        %v1276 = vadd.f32 %v1218, %v1269
        %v1277 = vadd.f32 %v1219, %v1271
        %1278 = vrot.lane.b32.xlu0 %v998, 108
        %v1279 = vpop.permute.xlu0 %1278
        %1280 = vrot.lane.b32.xlu0 %v999, 108
        %v1281 = vpop.permute.xlu0 %1280
        %1282 = vrot.lane.b32.xlu0 %v1000, 108
        %v1283 = vpop.permute.xlu0 %1282
        %1284 = vrot.lane.b32.xlu0 %v1001, 108
        %v1285 = vpop.permute.xlu0 %1284
        %1286 = vrot.lane.b32.xlu0 %v1002, 108
        %v1287 = vpop.permute.xlu0 %1286
        %1288 = vrot.lane.b32.xlu0 %v1003, 108
        %v1289 = vpop.permute.xlu0 %1288
        %v1290 = vsel %vm646, %v1279, %v1281
        %v1291 = vsel %vm646, %v1281, %v1283
        %v1292 = vsel %vm646, %v1285, %v1287
        %v1293 = vsel %vm646, %v1287, %v1289
        %v1300 = vmul.f32 %v1261, %v1290
        %v1301 = vmul.f32 %v1263, %v1291
        %v1302 = vmul.f32 %v1265, %v1283
        %v1303 = vmul.f32 %v1267, %v1292
        %v1304 = vmul.f32 %v1269, %v1293
        %v1305 = vmul.f32 %v1271, %v1289
        %v1306 = vadd.f32 %v1248, %v1300
        %v1307 = vadd.f32 %v1249, %v1301
        %v1308 = vadd.f32 %v1250, %v1302
        %v1309 = vadd.f32 %v1251, %v1303
        %v1310 = vadd.f32 %v1252, %v1304
        %v1311 = vadd.f32 %v1253, %v1305
        %v1312 = vsub.f32 %v774, %v968
        %v1313 = vsub.f32 %v775, %v969
        %v1314 = vsub.f32 %v776, %v970
        %v1315 = vsub.f32 %v777, %v971
        %v1316 = vsub.f32 %v778, %v972
        %v1317 = vsub.f32 %v779, %v973
        %v1318 = vmul.f32 %v1312, 1.442695
        %v1319 = vpow.pop %v1318
        %v1320 = vmul.f32 %v1313, 1.442695
        %v1321 = vpow.pop %v1320
        %v1322 = vmul.f32 %v1314, 1.442695
        %v1323 = vpow.pop %v1322
        %v1324 = vmul.f32 %v1315, 1.442695
        %v1325 = vpow.pop %v1324
        %v1326 = vmul.f32 %v1316, 1.442695
        %v1327 = vpow.pop %v1326
        %v1328 = vmul.f32 %v1317, 1.442695
        %v1329 = vpow.pop %v1328
        %v1330 = vadd.f32 %v1272, %v1319
        %v1331 = vadd.f32 %v1273, %v1321
        %v1332 = vadd.f32 %v1274, %v1323
        %v1333 = vadd.f32 %v1275, %v1325
        %v1334 = vadd.f32 %v1276, %v1327
        %v1335 = vadd.f32 %v1277, %v1329
        %1336 = vrot.lane.b32.xlu0 %v998, 92
        %v1337 = vpop.permute.xlu0 %1336
        %1338 = vrot.lane.b32.xlu0 %v999, 92
        %v1339 = vpop.permute.xlu0 %1338
        %1340 = vrot.lane.b32.xlu0 %v1000, 92
        %v1341 = vpop.permute.xlu0 %1340
        %1342 = vrot.lane.b32.xlu0 %v1001, 92
        %v1343 = vpop.permute.xlu0 %1342
        %1344 = vrot.lane.b32.xlu0 %v1002, 92
        %v1345 = vpop.permute.xlu0 %1344
        %1346 = vrot.lane.b32.xlu0 %v1003, 92
        %v1347 = vpop.permute.xlu0 %1346
        %v1348 = vsel %vm719, %v1337, %v1339
        %v1349 = vsel %vm719, %v1339, %v1341
        %v1350 = vsel %vm719, %v1343, %v1345
        %v1351 = vsel %vm719, %v1345, %v1347
        %v1358 = vmul.f32 %v1319, %v1348
        %v1359 = vmul.f32 %v1321, %v1349
        %v1360 = vmul.f32 %v1323, %v1341
        %v1361 = vmul.f32 %v1325, %v1350
        %v1362 = vmul.f32 %v1327, %v1351
        %v1363 = vmul.f32 %v1329, %v1347
        %v1364 = vadd.f32 %v1306, %v1358
        %v1365 = vadd.f32 %v1307, %v1359
        %v1366 = vadd.f32 %v1308, %v1360
        %v1367 = vadd.f32 %v1309, %v1361
        %v1368 = vadd.f32 %v1310, %v1362
        %v1369 = vadd.f32 %v1311, %v1363
        %v1370 = vsub.f32 %v847, %v968
        %v1371 = vsub.f32 %v848, %v969
        %v1372 = vsub.f32 %v849, %v970
        %v1373 = vsub.f32 %v850, %v971
        %v1374 = vsub.f32 %v851, %v972
        %v1375 = vsub.f32 %v852, %v973
        %v1376 = vmul.f32 %v1370, 1.442695
        %v1377 = vpow.pop %v1376
        %v1378 = vmul.f32 %v1371, 1.442695
        %v1379 = vpow.pop %v1378
        %v1380 = vmul.f32 %v1372, 1.442695
        %v1381 = vpow.pop %v1380
        %v1382 = vmul.f32 %v1373, 1.442695
        %v1383 = vpow.pop %v1382
        %v1384 = vmul.f32 %v1374, 1.442695
        %v1385 = vpow.pop %v1384
        %v1386 = vmul.f32 %v1375, 1.442695
        %v1387 = vpow.pop %v1386
        %v1388 = vadd.f32 %v1330, %v1377
        %v1389 = vadd.f32 %v1331, %v1379
        %v1390 = vadd.f32 %v1332, %v1381
        %v1391 = vadd.f32 %v1333, %v1383
        %v1392 = vadd.f32 %v1334, %v1385
        %v1393 = vadd.f32 %v1335, %v1387
        %1394 = vrot.lane.b32.xlu0 %v998, 91
        %v1395 = vpop.permute.xlu0 %1394
        %1396 = vrot.lane.b32.xlu0 %v999, 91
        %v1397 = vpop.permute.xlu0 %1396
        %1398 = vrot.lane.b32.xlu0 %v1000, 91
        %v1399 = vpop.permute.xlu0 %1398
        %1400 = vrot.lane.b32.xlu0 %v1001, 91
        %v1401 = vpop.permute.xlu0 %1400
        %1402 = vrot.lane.b32.xlu0 %v1002, 91
        %v1403 = vpop.permute.xlu0 %1402
        %1404 = vrot.lane.b32.xlu0 %v1003, 91
        %v1405 = vpop.permute.xlu0 %1404
        %v1406 = vsel %vm792, %v1395, %v1397
        %v1407 = vsel %vm792, %v1397, %v1399
        %v1408 = vsel %vm792, %v1401, %v1403
        %v1409 = vsel %vm792, %v1403, %v1405
        %v1416 = vmul.f32 %v1377, %v1406
        %v1417 = vmul.f32 %v1379, %v1407
        %v1418 = vmul.f32 %v1381, %v1399
        %v1419 = vmul.f32 %v1383, %v1408
        %v1420 = vmul.f32 %v1385, %v1409
        %v1421 = vmul.f32 %v1387, %v1405
        %v1422 = vadd.f32 %v1364, %v1416
        %v1423 = vadd.f32 %v1365, %v1417
        %v1424 = vadd.f32 %v1366, %v1418
        %v1425 = vadd.f32 %v1367, %v1419
        %v1426 = vadd.f32 %v1368, %v1420
        %v1427 = vadd.f32 %v1369, %v1421
        %v1428 = vsub.f32 %v920, %v968
        %v1429 = vsub.f32 %v921, %v969
        %v1430 = vsub.f32 %v922, %v970
        %v1431 = vsub.f32 %v923, %v971
        %v1432 = vsub.f32 %v924, %v972
        %v1433 = vsub.f32 %v925, %v973
        %v1434 = vmul.f32 %v1428, 1.442695
        %v1435 = vpow.pop %v1434
        %v1436 = vmul.f32 %v1429, 1.442695
        %v1437 = vpow.pop %v1436
        %v1438 = vmul.f32 %v1430, 1.442695
        %v1439 = vpow.pop %v1438
        %v1440 = vmul.f32 %v1431, 1.442695
        %v1441 = vpow.pop %v1440
        %v1442 = vmul.f32 %v1432, 1.442695
        %v1443 = vpow.pop %v1442
        %v1444 = vmul.f32 %v1433, 1.442695
        %v1445 = vpow.pop %v1444
        %v1446 = vadd.f32 %v1388, %v1435
        %v1447 = vadd.f32 %v1389, %v1437
        %v1448 = vadd.f32 %v1390, %v1439
        %v1449 = vadd.f32 %v1391, %v1441
        %v1450 = vadd.f32 %v1392, %v1443
        %v1451 = vadd.f32 %v1393, %v1445
        %1452 = vrot.lane.b32.xlu0 %v998, 90
        %v1453 = vpop.permute.xlu0 %1452
        %1454 = vrot.lane.b32.xlu0 %v999, 90
        %v1455 = vpop.permute.xlu0 %1454
        %1456 = vrot.lane.b32.xlu0 %v1000, 90
        %v1457 = vpop.permute.xlu0 %1456
        %1458 = vrot.lane.b32.xlu0 %v1001, 90
        %v1459 = vpop.permute.xlu0 %1458
        %1460 = vrot.lane.b32.xlu0 %v1002, 90
        %v1461 = vpop.permute.xlu0 %1460
        %1462 = vrot.lane.b32.xlu0 %v1003, 90
        %v1463 = vpop.permute.xlu0 %1462
        %v1464 = vsel %vm865, %v1453, %v1455
        %v1465 = vsel %vm865, %v1455, %v1457
        %v1466 = vsel %vm865, %v1459, %v1461
        %v1467 = vsel %vm865, %v1461, %v1463
        %v1474 = vmul.f32 %v1435, %v1464
        %v1475 = vmul.f32 %v1437, %v1465
        %v1476 = vmul.f32 %v1439, %v1457
        %v1477 = vmul.f32 %v1441, %v1466
        %v1478 = vmul.f32 %v1443, %v1467
        %v1479 = vmul.f32 %v1445, %v1463
        %v1480 = vadd.f32 %v1422, %v1474
        %v1481 = vadd.f32 %v1423, %v1475
        %v1482 = vadd.f32 %v1424, %v1476
        %v1483 = vadd.f32 %v1425, %v1477
        %v1484 = vadd.f32 %v1426, %v1478
        %v1485 = vadd.f32 %v1427, %v1479
        %v1486 = vrcp.pop %v1446
        %v1487 = vrcp.pop %v1447
        %v1488 = vrcp.pop %v1448
        %v1489 = vrcp.pop %v1449
        %v1490 = vrcp.pop %v1450
        %v1491 = vrcp.pop %v1451
        %v1492 = vmul.f32 %v1480, %v1486
        %v1493 = vmul.f32 %v1481, %v1487
        %v1494 = vmul.f32 %v1482, %v1488
        %v1495 = vmul.f32 %v1483, %v1489
        %v1496 = vmul.f32 %v1484, %v1490
        %v1497 = vmul.f32 %v1485, %v1491
        %1498 = vst [vmem:[%s268] sm:$0xff] %v1492
        %1499 = vst [vmem:[%s268 + $0x8] sm:$0xff] %v1493
        %1500 = vst.msk [vmem:[%s268 + $0x10] sm:$0xff] %vm303, %v1494
        %1501 = vst [vmem:[%s268 + $0x18] sm:$0xff] %v1495
        %1502 = vst [vmem:[%s268 + $0x20] sm:$0xff] %v1496
        %1503 = vst.msk [vmem:[%s268 + $0x28] sm:$0xff] %vm303, %v1497
        %s1504 = sand.u32 %s109, 1
        %s1505 = scalar_lea.sflag [#allocation4], %s1504
        %s1506 = sand.u32 %s109, 1
        %s1507 = smul.addr %s1506, 48
        %s1508 = scalar_lea.vmem [#allocation8], %s1507
        // Predicated region
        $region45: #{tpu_custom_call.1} parent=31 // pred_check
          %p1509 = pneg %p119
        $region46: #{tpu_custom_call.1} parent=31 // pred_check_branch
          %1511 = sbr.rel (%p1509) target = $region48
        $region47: #{tpu_custom_call.1} parent=31 // pred_region
          %s1512 = smul.u32 2, %s23
          %s1514 = ssub.s32 768, 768
          %1515 = vsyncadd %s1505, %s1514
          %s1516 = smul.addr %s1512, 3
          %s1517 = smul.addr %s1516, 128
          %s1518 = scalar_lea.hbm %s3, %s1517
          %s1519 = sshll.u32 %s1508, 4
          %s1520 = int_to_ptr.vmem [resolvable:$true] %s1519
          %1525 = dma.vmem_to_hbm [thread:$0]  %s1520, 768, %s1518, %s1505, 384, 384, 24
        $region48: #{tpu_custom_call.1} parent=31 // pred_fallthru
          _
      $region32: #{tpu_custom_call.1} parent=5 // pred_fallthru
        _
      %p1526 = scmp.le.s32.totalorder 2, %s18
      // Predicated region
      $region49: #{tpu_custom_call.1} parent=5 // pred_check
        %p1527 = pneg %p1526
      $region50: #{tpu_custom_call.1} parent=5 // pred_check_branch
        %1529 = sbr.rel (%p1527) target = $region52
      $region51: #{tpu_custom_call.1} parent=5 // pred_region
        %s1530 = ssub.s32 %s18, 2
        // Predicated region
        $region53: #{tpu_custom_call.1} parent=51 // pred_check
          %p1531 = pneg %p125
        $region54: #{tpu_custom_call.1} parent=51 // pred_check_branch
          %1533 = sbr.rel (%p1531) target = $region56
        $region55: #{tpu_custom_call.1} parent=51 // pred_region
          %s1534 = sand.u32 %s110, 1
          %s1535 = scalar_lea.sflag [#allocation4], %s1534
          %s1536 = sand.u32 %s110, 1
          %s1537 = smul.addr %s1536, 48
          %s1538 = scalar_lea.vmem [#allocation8], %s1537
          %1539 = dma.done %s1535, 768
        $region56: #{tpu_custom_call.1} parent=51 // pred_fallthru
          _
      $region52: #{tpu_custom_call.1} parent=5 // pred_fallthru
        _
    $region6: #{tpu_custom_call.1} parent=1 // loop_footer
      %s22 = sadd.s32 1, %s18
    $region7: #{tpu_custom_call.1} parent=1 // loop_footer_branch
      %17 = sbr.rel target = $region3
    $region8: #{tpu_custom_call.1} parent=1 // loop_exit
      _
    %1540 = vsyncpa [#allocation3], 1
    %s1541 = scalar_lea.sflag [#allocation3], 1
    %1542 = vsyncpa %s1541, 1
    %1543 = vsyncpa [#allocation6], 1
    %s1544 = scalar_lea.sflag [#allocation6], 1
    %1545 = vsyncpa %s1544, 1
    %1546 = vsyncpa [#allocation4], 1
    %s1547 = scalar_lea.sflag [#allocation4], 1
    %1548 = vsyncpa %s1547, 1

</llo_original>
